<compile_context>
chip_gen: v5e
topology: v5e:2x2
jax: 0.10.0
libtpu: 0.0.40
codegen_flags: <defaults>
</compile_context>

<pallas_src>
import functools

import jax
import jax.numpy as jnp
from jax.experimental import pallas as pl
from jax.experimental.pallas import tpu as pltpu

# ---- module constants (from DCFNetFeature / DCFNet) ----
LRN_SIZE = 5
LRN_ALPHA = 1e-4
LRN_BETA = 0.75   # encoded in-kernel as rsqrt(d) * sqrt(rsqrt(d)) == d**-0.75
LRN_K = 1.0
LAMBDA0 = 1e-4


def _round_up(x, m):
    return ((x + m - 1) // m) * m


# --------------------------------------------------------------------------
# Kernel 1: fused feature extractor  conv3x3 -> ReLU -> conv3x3 -> LRN
# One grid step == one image, channel-major [C, flattened-space-in-lanes].
# A 3x3 "VALID" conv on a flattened [C, H*W] slab becomes a single matmul
# against an im2col patch whose rows are the 9 lane-shifted copies of the
# input (shift = di*W + dj).  Only the last 2 (resp. 4) columns of each image
# row are junk; they never feed a valid output and are sliced in the wrapper,
# so no halo/reshape logic is needed inside the kernel.
# --------------------------------------------------------------------------
def _feature_kernel(x_ref, w1_ref, b1_ref, w2_ref, b2_ref, band_ref,
                    o_ref, p1_ref, f1_ref, p2_ref, *, W, L1, L2):
    Cin = x_ref.shape[1]
    C = o_ref.shape[1]
    cdtype = f1_ref.dtype

    # ---- im2col patch for conv1: P1[k*Cin + c, j] = x[c, j + (k//3)*W + k%3]
    # (P1 kept f32 so the 3-row sublane-offset stores stay unpacked; it is
    #  cast to the compute dtype only when fed to the MXU.)
    for k in range(9):
        off = (k // 3) * W + (k % 3)
        p1_ref[pl.ds(k * Cin, Cin), :] = x_ref[0, :, pl.ds(off, L1)]

    # ---- conv1 + bias + ReLU  (single K=9*Cin matmul; f1 lives only in VMEM)
    a1 = jnp.dot(w1_ref[...], p1_ref[...].astype(w1_ref.dtype),
                 preferred_element_type=jnp.float32)
    f1_ref[...] = jnp.maximum(a1 + b1_ref[...], 0.0).astype(cdtype)

    # ---- im2col patch for conv2: P2[k*C + c, j] = f1[c, j + (k//3)*W + k%3]
    # (32-row aligned stores; lane-offset reads are cheap XLU shifts.)
    for k in range(9):
        off = (k // 3) * W + (k % 3)
        p2_ref[pl.ds(k * C, C), :] = f1_ref[:, pl.ds(off, L2)]

    # ---- conv2 + bias  (single K=9*C matmul)
    y = jnp.dot(w2_ref[...], p2_ref[...], preferred_element_type=jnp.float32)
    y = y + b2_ref[...]

    # ---- LocalResponseNorm over channels (sublane axis): banded [C,C] matmul
    # gives the channel-window sum of squares; d**-0.75 = rsqrt(d)*sqrt(rsqrt(d)).
    s = jnp.dot(band_ref[...], (y * y).astype(band_ref.dtype),
                preferred_element_type=jnp.float32)
    d = LRN_K + (LRN_ALPHA / LRN_SIZE) * s
    rs = jax.lax.rsqrt(d)
    o_ref[0] = y * (rs * jnp.sqrt(rs))


def dcfnet_feature(imgs, w1, b1, w2, b2, *, compute_dtype=jnp.bfloat16):
    """imgs: [B, 3, H, W] (NCHW) -> features [B, 32, H-4, W-4] (NCHW)."""
    B, Cin, H, W = imgs.shape
    C = w1.shape[0]
    L2 = (H - 4) * W          # conv2 rows, full width (junk cols sliced below)
    L1 = (H - 2) * W + 8      # conv1 rows + small defined tail for conv2 reads
    HWp = H * W + 16          # zero slack: max shifted read index is H*W + 9

    # flattened NCHW -- no transpose anywhere on the activation path
    xflat = imgs.reshape(B, Cin, H * W)
    xflat = jnp.pad(xflat, ((0, 0), (0, 0), (0, HWp - H * W)))

    # weights as [Cout, 9*Cin], row order (k = di*3 + dj) major, cin minor,
    # matching the patch layout
    w1p = jnp.transpose(w1, (0, 2, 3, 1)).reshape(C, 9 * Cin).astype(compute_dtype)
    w2p = jnp.transpose(w2, (0, 2, 3, 1)).reshape(C, 9 * C).astype(compute_dtype)
    b1p = b1.reshape(C, 1).astype(jnp.float32)
    b2p = b2.reshape(C, 1).astype(jnp.float32)

    # banded matrix for the LRN channel-window sum (|c - c'| <= size//2)
    idx = jnp.arange(C)
    band = (jnp.abs(idx[:, None] - idx[None, :]) <= LRN_SIZE // 2).astype(compute_dtype)

    kernel = functools.partial(_feature_kernel, W=W, L1=L1, L2=L2)
    out = pl.pallas_call(
        kernel,
        out_shape=jax.ShapeDtypeStruct((B, C, L2), jnp.float32),
        grid=(B,),                                   # 2N images: even, megacore-friendly
        in_specs=[
            pl.BlockSpec((1, Cin, HWp), lambda n: (n, 0, 0)),
            pl.BlockSpec((C, 9 * Cin), lambda n: (0, 0)),
            pl.BlockSpec((C, 1), lambda n: (0, 0)),
            pl.BlockSpec((C, 9 * C), lambda n: (0, 0)),
            pl.BlockSpec((C, 1), lambda n: (0, 0)),
            pl.BlockSpec((C, C), lambda n: (0, 0)),
        ],
        out_specs=pl.BlockSpec((1, C, L2), lambda n: (n, 0, 0)),
        scratch_shapes=[
            pltpu.VMEM((9 * Cin, L1), jnp.float32),   # P1 (tiny; unpacked stores)
            pltpu.VMEM((C, L1), compute_dtype),       # f1
            pltpu.VMEM((9 * C, L2), compute_dtype),   # P2
        ],
        compiler_params=pltpu.CompilerParams(
            dimension_semantics=("parallel",),
            vmem_limit_bytes=48 * 1024 * 1024),
    )(xflat, w1p, b1p, w2p, b2p, band)

    # drop the junk full-width columns; output is already NCHW for the FFT
    return out.reshape(B, C, H - 4, W)[:, :, :, :W - 4]


# --------------------------------------------------------------------------
# Kernel 2: DCF correlation in the Fourier domain, tiled over (N, F).
#   kzzf   = sum_c |zf|^2
#   kxzf   = sum_c xf * conj(zf)
#   alphaf = yf / (kzzf + lambda0)
#   out    = kxzf * alphaf            (real/imag returned separately)
# --------------------------------------------------------------------------
def _dcf_kernel(zr_ref, zi_ref, xr_ref, xi_ref, yr_ref, yi_ref, or_ref, oi_ref):
    zr, zi = zr_ref[0], zi_ref[0]                                 # [C, Tf]
    xr, xi = xr_ref[0], xi_ref[0]
    kzzf = jnp.sum(zr * zr + zi * zi, axis=0, keepdims=True)      # [1, Tf]
    kxzf_r = jnp.sum(xr * zr + xi * zi, axis=0, keepdims=True)    # x * conj(z)
    kxzf_i = jnp.sum(xi * zr - xr * zi, axis=0, keepdims=True)
    inv = pl.reciprocal(kzzf + LAMBDA0)           # exact: kernel is memory-bound
    ar = yr_ref[0] * inv
    ai = yi_ref[0] * inv
    or_ref[0] = kxzf_r * ar - kxzf_i * ai
    oi_ref[0] = kxzf_r * ai + kxzf_i * ar


def dcf_fourier(zr, zi, xr, xi, yr, yi):
    N, C, F = zr.shape
    tile_f = 512 if F >= 512 else _round_up(F, 128)
    Fp = _round_up(F, tile_f)
    if Fp != F:
        padf = lambda a: jnp.pad(a, ((0, 0), (0, 0), (0, Fp - F)))
        zr, zi, xr, xi, yr, yi = map(padf, (zr, zi, xr, xi, yr, yi))

    spec_zx = pl.BlockSpec((1, C, tile_f), lambda n, f: (n, 0, f))
    spec_y = pl.BlockSpec((1, 1, tile_f), lambda n, f: (0, 0, f))
    spec_o = pl.BlockSpec((1, 1, tile_f), lambda n, f: (n, 0, f))
    oshape = jax.ShapeDtypeStruct((N, 1, Fp), jnp.float32)
    out_r, out_i = pl.pallas_call(
        _dcf_kernel,
        out_shape=(oshape, oshape),
        grid=(N, Fp // tile_f),
        in_specs=[spec_zx, spec_zx, spec_zx, spec_zx, spec_y, spec_y],
        out_specs=(spec_o, spec_o),
        compiler_params=pltpu.CompilerParams(
            dimension_semantics=("parallel", "parallel")),
    )(zr, zi, xr, xi, yr, yi)
    return out_r[..., :F], out_i[..., :F]


# --------------------------------------------------------------------------
# Full forward
# --------------------------------------------------------------------------
def dcfnet_forward(z, x, w1, b1, w2, b2, yf, *, compute_dtype=jnp.bfloat16):
    N = z.shape[0]
    C = w1.shape[0]
    # one batched feature pass for z and x (halves call / weight-DMA overhead)
    feats = dcfnet_feature(jnp.concatenate([z, x], axis=0), w1, b1, w2, b2,
                           compute_dtype=compute_dtype)
    fz, fx = feats[:N], feats[N:]

    zf = jnp.fft.rfft2(fz)                      # [N, C, Hf, Wf] complex64
    xf = jnp.fft.rfft2(fx)
    Hf, Wf = zf.shape[-2], zf.shape[-1]
    F = Hf * Wf
    zr = jnp.real(zf).reshape(N, C, F)
    zi = jnp.imag(zf).reshape(N, C, F)
    xr = jnp.real(xf).reshape(N, C, F)
    xi = jnp.imag(xf).reshape(N, C, F)
    yr = jnp.real(yf).astype(jnp.float32).reshape(1, 1, F)
    yi = jnp.imag(yf).astype(jnp.float32).reshape(1, 1, F)

    out_r, out_i = dcf_fourier(zr, zi, xr, xi, yr, yi)
    spec = (out_r + 1j * out_i).reshape(N, 1, Hf, Wf)
    return jnp.fft.irfft2(spec)                 # [N, 1, H-4, W-4]


# --------------------------------------------------------------------------
# Pure-JAX reference (mirrors the PyTorch module) for the correctness check
# --------------------------------------------------------------------------
def _ref_conv(x, w, b):
    y = jax.lax.conv_general_dilated(
        x, w, (1, 1), "VALID", dimension_numbers=("NCHW", "OIHW", "NCHW"))
    return y + b.reshape(1, -1, 1, 1)


def _ref_lrn(x):
    C = x.shape[1]
    xsq = x * x
    pad = jnp.pad(xsq, ((0, 0), (LRN_SIZE // 2, (LRN_SIZE - 1) // 2), (0, 0), (0, 0)))
    s = sum(pad[:, i:i + C] for i in range(LRN_SIZE))
    div = (LRN_K + (LRN_ALPHA / LRN_SIZE) * s) ** LRN_BETA
    return x / div


def ref_forward(z, x, w1, b1, w2, b2, yf):
    def feat(a):
        a = jnp.maximum(_ref_conv(a, w1, b1), 0.0)
        a = _ref_conv(a, w2, b2)
        return _ref_lrn(a)

    fz, fx = feat(z), feat(x)
    zf = jnp.fft.rfft2(fz)
    xf = jnp.fft.rfft2(fx)
    kzzf = jnp.sum(jnp.real(zf) ** 2 + jnp.imag(zf) ** 2, axis=1, keepdims=True)
    kxzf = jnp.sum(xf * jnp.conj(zf), axis=1, keepdims=True)
    alphaf = yf / (kzzf + LAMBDA0)
    return jnp.fft.irfft2(kxzf * alphaf)


# --------------------------------------------------------------------------
if __name__ == "__main__":
    key = jax.random.PRNGKey(0)
    k1, k2, k3, k4, k5, k6 = jax.random.split(key, 6)

    N, Cin, H, W = 2, 3, 16, 16
    C = 32
    z = jax.random.normal(k1, (N, Cin, H, W), jnp.float32)
    x = jax.random.normal(k2, (N, Cin, H, W), jnp.float32)

    # deterministic synthetic parameters (shapes from DCFNetFeature.__init__)
    w1 = 0.1 * jax.random.normal(k3, (C, Cin, 3, 3), jnp.float32)
    b1 = 0.01 * jax.random.normal(k4, (C,), jnp.float32)
    w2 = 0.1 * jax.random.normal(k5, (C, C, 3, 3), jnp.float32)
    b2 = 0.01 * jax.random.normal(k6, (C,), jnp.float32)

    # config.yf: rfft2 of a Gaussian label at the feature-map resolution
    H2, W2 = H - 4, W - 4
    yy, xx = jnp.arange(H2), jnp.arange(W2)
    dy = jnp.minimum(yy, H2 - yy)[:, None].astype(jnp.float32)
    dx = jnp.minimum(xx, W2 - xx)[None, :].astype(jnp.float32)
    ylabel = jnp.exp(-(dy * dy + dx * dx) / (2.0 * 2.0 ** 2))
    yf = jnp.fft.rfft2(ylabel)[None, None]            # [1, 1, H2, W2//2+1]

    ref = jax.block_until_ready(ref_forward(z, x, w1, b1, w2, b2, yf))
    scale = max(1.0, float(jnp.max(jnp.abs(ref))))

    # f32 path: tight structural check.  bf16 path: the default perf mode
    # (MXU runs bf16, accumulation stays f32) validated at a looser tolerance.
    for dtype, tol in ((jnp.float32, 1e-2), (jnp.bfloat16, 5e-2)):
        fwd = jax.jit(functools.partial(dcfnet_forward, compute_dtype=dtype))
        resp = jax.block_until_ready(fwd(z, x, w1, b1, w2, b2, yf))
        assert resp.shape == (N, 1, H2, W2), resp.shape
        max_err = float(jnp.max(jnp.abs(resp - ref)))
        assert max_err < tol * scale, f"dtype={dtype}: max_err={max_err}"

    print("KERNEL_OK")
</pallas_src>

<mosaic_0001>
module attributes {stable_mosaic.version = 11 : i64} {
  func.func @_feature_kernel(%arg0: i32, %arg1: memref<1x3x272xf32, #tpu.memory_space<vmem>>, %arg2: memref<32x27xf32, #tpu.memory_space<vmem>>, %arg3: memref<32x1xf32, #tpu.memory_space<vmem>>, %arg4: memref<32x288xf32, #tpu.memory_space<vmem>>, %arg5: memref<32x1xf32, #tpu.memory_space<vmem>>, %arg6: memref<32x32xf32, #tpu.memory_space<vmem>>, %arg7: memref<1x32x192xf32, #tpu.memory_space<vmem>>, %arg8: memref<27x232xf32, #tpu.memory_space<vmem>>, %arg9: memref<32x232xf32, #tpu.memory_space<vmem>>, %arg10: memref<288x192xf32, #tpu.memory_space<vmem>>) attributes {dimension_semantics = [#tpu.dimension_semantics<parallel>], iteration_bounds = array<i64: 4>, scalar_prefetch = 0 : i64, scratch_operands = 3 : i64, tpu.core_type = #tpu.core_type<tc>, window_params = [{transform_indices = @transform_0, window_bounds = array<i64: 1, 3, 272>}, {pipeline_mode = #tpu.pipeline_mode<synchronous>, transform_indices = @transform_1, window_bounds = array<i64: 32, 27>}, {pipeline_mode = #tpu.pipeline_mode<synchronous>, transform_indices = @transform_2, window_bounds = array<i64: 32, 1>}, {pipeline_mode = #tpu.pipeline_mode<synchronous>, transform_indices = @transform_3, window_bounds = array<i64: 32, 288>}, {pipeline_mode = #tpu.pipeline_mode<synchronous>, transform_indices = @transform_4, window_bounds = array<i64: 32, 1>}, {pipeline_mode = #tpu.pipeline_mode<synchronous>, transform_indices = @transform_5, window_bounds = array<i64: 32, 32>}, {transform_indices = @transform_6, window_bounds = array<i64: 1, 32, 192>}]} {
    %c0 = arith.constant 0 : index
    %c0_0 = arith.constant 0 : index
    %c0_1 = arith.constant 0 : index
    %0 = vector.load %arg1[%c0, %c0_0, %c0_1] : memref<1x3x272xf32, #tpu.memory_space<vmem>>, vector<1x3x232xf32>
    %1 = vector.shape_cast %0 : vector<1x3x232xf32> to vector<3x232xf32>
    %c0_2 = arith.constant 0 : index
    %c0_3 = arith.constant 0 : index
    %2 = vector.load %arg8[%c0_2, %c0_3] : memref<27x232xf32, #tpu.memory_space<vmem>>, vector<3x232xf32>
    tpu.vector_store %arg8[%c0_2, %c0_3], %1 {strides = array<i32>} : memref<27x232xf32, #tpu.memory_space<vmem>>, vector<3x232xf32>,
    %c0_4 = arith.constant 0 : index
    %c0_5 = arith.constant 0 : index
    %c1 = arith.constant 1 : index
    %3 = vector.load %arg1[%c0_4, %c0_5, %c1] : memref<1x3x272xf32, #tpu.memory_space<vmem>>, vector<1x3x232xf32>
    %4 = vector.shape_cast %3 : vector<1x3x232xf32> to vector<3x232xf32>
    %c3 = arith.constant 3 : index
    %c0_6 = arith.constant 0 : index
    %5 = vector.load %arg8[%c3, %c0_6] : memref<27x232xf32, #tpu.memory_space<vmem>>, vector<3x232xf32>
    tpu.vector_store %arg8[%c3, %c0_6], %4 {strides = array<i32>} : memref<27x232xf32, #tpu.memory_space<vmem>>, vector<3x232xf32>,
    %c0_7 = arith.constant 0 : index
    %c0_8 = arith.constant 0 : index
    %c2 = arith.constant 2 : index
    %6 = vector.load %arg1[%c0_7, %c0_8, %c2] : memref<1x3x272xf32, #tpu.memory_space<vmem>>, vector<1x3x232xf32>
    %7 = vector.shape_cast %6 : vector<1x3x232xf32> to vector<3x232xf32>
    %c6 = arith.constant 6 : index
    %c0_9 = arith.constant 0 : index
    %8 = vector.load %arg8[%c6, %c0_9] : memref<27x232xf32, #tpu.memory_space<vmem>>, vector<3x232xf32>
    tpu.vector_store %arg8[%c6, %c0_9], %7 {strides = array<i32>} : memref<27x232xf32, #tpu.memory_space<vmem>>, vector<3x232xf32>,
    %c0_10 = arith.constant 0 : index
    %c0_11 = arith.constant 0 : index
    %c16 = arith.constant 16 : index
    %9 = vector.load %arg1[%c0_10, %c0_11, %c16] : memref<1x3x272xf32, #tpu.memory_space<vmem>>, vector<1x3x232xf32>
    %10 = vector.shape_cast %9 : vector<1x3x232xf32> to vector<3x232xf32>
    %c9 = arith.constant 9 : index
    %c0_12 = arith.constant 0 : index
    %11 = vector.load %arg8[%c9, %c0_12] : memref<27x232xf32, #tpu.memory_space<vmem>>, vector<3x232xf32>
    tpu.vector_store %arg8[%c9, %c0_12], %10 {strides = array<i32>} : memref<27x232xf32, #tpu.memory_space<vmem>>, vector<3x232xf32>,
    %c0_13 = arith.constant 0 : index
    %c0_14 = arith.constant 0 : index
    %c17 = arith.constant 17 : index
    %12 = vector.load %arg1[%c0_13, %c0_14, %c17] : memref<1x3x272xf32, #tpu.memory_space<vmem>>, vector<1x3x232xf32>
    %13 = vector.shape_cast %12 : vector<1x3x232xf32> to vector<3x232xf32>
    %c12 = arith.constant 12 : index
    %c0_15 = arith.constant 0 : index
    %14 = vector.load %arg8[%c12, %c0_15] : memref<27x232xf32, #tpu.memory_space<vmem>>, vector<3x232xf32>
    tpu.vector_store %arg8[%c12, %c0_15], %13 {strides = array<i32>} : memref<27x232xf32, #tpu.memory_space<vmem>>, vector<3x232xf32>,
    %c0_16 = arith.constant 0 : index
    %c0_17 = arith.constant 0 : index
    %c18 = arith.constant 18 : index
    %15 = vector.load %arg1[%c0_16, %c0_17, %c18] : memref<1x3x272xf32, #tpu.memory_space<vmem>>, vector<1x3x232xf32>
    %16 = vector.shape_cast %15 : vector<1x3x232xf32> to vector<3x232xf32>
    %c15 = arith.constant 15 : index
    %c0_18 = arith.constant 0 : index
    %17 = vector.load %arg8[%c15, %c0_18] : memref<27x232xf32, #tpu.memory_space<vmem>>, vector<3x232xf32>
    tpu.vector_store %arg8[%c15, %c0_18], %16 {strides = array<i32>} : memref<27x232xf32, #tpu.memory_space<vmem>>, vector<3x232xf32>,
    %c0_19 = arith.constant 0 : index
    %c0_20 = arith.constant 0 : index
    %c32 = arith.constant 32 : index
    %18 = vector.load %arg1[%c0_19, %c0_20, %c32] : memref<1x3x272xf32, #tpu.memory_space<vmem>>, vector<1x3x232xf32>
    %19 = vector.shape_cast %18 : vector<1x3x232xf32> to vector<3x232xf32>
    %c18_21 = arith.constant 18 : index
    %c0_22 = arith.constant 0 : index
    %20 = vector.load %arg8[%c18_21, %c0_22] : memref<27x232xf32, #tpu.memory_space<vmem>>, vector<3x232xf32>
    tpu.vector_store %arg8[%c18_21, %c0_22], %19 {strides = array<i32>} : memref<27x232xf32, #tpu.memory_space<vmem>>, vector<3x232xf32>,
    %c0_23 = arith.constant 0 : index
    %c0_24 = arith.constant 0 : index
    %c33 = arith.constant 33 : index
    %21 = vector.load %arg1[%c0_23, %c0_24, %c33] : memref<1x3x272xf32, #tpu.memory_space<vmem>>, vector<1x3x232xf32>
    %22 = vector.shape_cast %21 : vector<1x3x232xf32> to vector<3x232xf32>
    %c21 = arith.constant 21 : index
    %c0_25 = arith.constant 0 : index
    %23 = vector.load %arg8[%c21, %c0_25] : memref<27x232xf32, #tpu.memory_space<vmem>>, vector<3x232xf32>
    tpu.vector_store %arg8[%c21, %c0_25], %22 {strides = array<i32>} : memref<27x232xf32, #tpu.memory_space<vmem>>, vector<3x232xf32>,
    %c0_26 = arith.constant 0 : index
    %c0_27 = arith.constant 0 : index
    %c34 = arith.constant 34 : index
    %24 = vector.load %arg1[%c0_26, %c0_27, %c34] : memref<1x3x272xf32, #tpu.memory_space<vmem>>, vector<1x3x232xf32>
    %25 = vector.shape_cast %24 : vector<1x3x232xf32> to vector<3x232xf32>
    %c24 = arith.constant 24 : index
    %c0_28 = arith.constant 0 : index
    %26 = vector.load %arg8[%c24, %c0_28] : memref<27x232xf32, #tpu.memory_space<vmem>>, vector<3x232xf32>
    tpu.vector_store %arg8[%c24, %c0_28], %25 {strides = array<i32>} : memref<27x232xf32, #tpu.memory_space<vmem>>, vector<3x232xf32>,
    %c0_29 = arith.constant 0 : index
    %c0_30 = arith.constant 0 : index
    %27 = vector.load %arg2[%c0_29, %c0_30] : memref<32x27xf32, #tpu.memory_space<vmem>>, vector<32x27xf32>
    %c0_31 = arith.constant 0 : index
    %c0_32 = arith.constant 0 : index
    %28 = vector.load %arg8[%c0_31, %c0_32] : memref<27x232xf32, #tpu.memory_space<vmem>>, vector<27x232xf32>
    %cst = arith.constant dense<0.000000e+00> : vector<32x232xf32>
    %29 = tpu.matmul %27, %28, %cst {dimension_numbers = #tpu.dot_dimension_numbers<[1], [0], [0], [1], [0, 0, 1, 1], [], []>} : vector<32x27xf32>, vector<27x232xf32>, vector<32x232xf32> -> vector<32x232xf32>
    %c0_33 = arith.constant 0 : index
    %c0_34 = arith.constant 0 : index
    %30 = vector.load %arg3[%c0_33, %c0_34] : memref<32x1xf32, #tpu.memory_space<vmem>>, vector<32x1xf32>
    %31 = vector.broadcast %30 : vector<32x1xf32> to vector<32x232xf32>
    %32 = arith.addf %29, %31 : vector<32x232xf32>
    %cst_35 = arith.constant 0.000000e+00 : f32
    %33 = vector.broadcast %cst_35 : f32 to vector<32x232xf32>
    %34 = arith.maximumf %32, %33 : vector<32x232xf32>
    %c0_36 = arith.constant 0 : index
    %c0_37 = arith.constant 0 : index
    %35 = vector.load %arg9[%c0_36, %c0_37] : memref<32x232xf32, #tpu.memory_space<vmem>>, vector<32x232xf32>
    tpu.vector_store %arg9[%c0_36, %c0_37], %34 {strides = array<i32>} : memref<32x232xf32, #tpu.memory_space<vmem>>, vector<32x232xf32>,
    %c0_38 = arith.constant 0 : index
    %c0_39 = arith.constant 0 : index
    %36 = vector.load %arg9[%c0_38, %c0_39] : memref<32x232xf32, #tpu.memory_space<vmem>>, vector<32x192xf32>
    %c0_40 = arith.constant 0 : index
    %c0_41 = arith.constant 0 : index
    %37 = vector.load %arg10[%c0_40, %c0_41] : memref<288x192xf32, #tpu.memory_space<vmem>>, vector<32x192xf32>
    tpu.vector_store %arg10[%c0_40, %c0_41], %36 {strides = array<i32>} : memref<288x192xf32, #tpu.memory_space<vmem>>, vector<32x192xf32>,
    %c0_42 = arith.constant 0 : index
    %c1_43 = arith.constant 1 : index
    %38 = vector.load %arg9[%c0_42, %c1_43] : memref<32x232xf32, #tpu.memory_space<vmem>>, vector<32x192xf32>
    %c32_44 = arith.constant 32 : index
    %c0_45 = arith.constant 0 : index
    %39 = vector.load %arg10[%c32_44, %c0_45] : memref<288x192xf32, #tpu.memory_space<vmem>>, vector<32x192xf32>
    tpu.vector_store %arg10[%c32_44, %c0_45], %38 {strides = array<i32>} : memref<288x192xf32, #tpu.memory_space<vmem>>, vector<32x192xf32>,
    %c0_46 = arith.constant 0 : index
    %c2_47 = arith.constant 2 : index
    %40 = vector.load %arg9[%c0_46, %c2_47] : memref<32x232xf32, #tpu.memory_space<vmem>>, vector<32x192xf32>
    %c64 = arith.constant 64 : index
    %c0_48 = arith.constant 0 : index
    %41 = vector.load %arg10[%c64, %c0_48] : memref<288x192xf32, #tpu.memory_space<vmem>>, vector<32x192xf32>
    tpu.vector_store %arg10[%c64, %c0_48], %40 {strides = array<i32>} : memref<288x192xf32, #tpu.memory_space<vmem>>, vector<32x192xf32>,
    %c0_49 = arith.constant 0 : index
    %c16_50 = arith.constant 16 : index
    %42 = vector.load %arg9[%c0_49, %c16_50] : memref<32x232xf32, #tpu.memory_space<vmem>>, vector<32x192xf32>
    %c96 = arith.constant 96 : index
    %c0_51 = arith.constant 0 : index
    %43 = vector.load %arg10[%c96, %c0_51] : memref<288x192xf32, #tpu.memory_space<vmem>>, vector<32x192xf32>
    tpu.vector_store %arg10[%c96, %c0_51], %42 {strides = array<i32>} : memref<288x192xf32, #tpu.memory_space<vmem>>, vector<32x192xf32>,
    %c0_52 = arith.constant 0 : index
    %c17_53 = arith.constant 17 : index
    %44 = vector.load %arg9[%c0_52, %c17_53] : memref<32x232xf32, #tpu.memory_space<vmem>>, vector<32x192xf32>
    %c128 = arith.constant 128 : index
    %c0_54 = arith.constant 0 : index
    %45 = vector.load %arg10[%c128, %c0_54] : memref<288x192xf32, #tpu.memory_space<vmem>>, vector<32x192xf32>
    tpu.vector_store %arg10[%c128, %c0_54], %44 {strides = array<i32>} : memref<288x192xf32, #tpu.memory_space<vmem>>, vector<32x192xf32>,
    %c0_55 = arith.constant 0 : index
    %c18_56 = arith.constant 18 : index
    %46 = vector.load %arg9[%c0_55, %c18_56] : memref<32x232xf32, #tpu.memory_space<vmem>>, vector<32x192xf32>
    %c160 = arith.constant 160 : index
    %c0_57 = arith.constant 0 : index
    %47 = vector.load %arg10[%c160, %c0_57] : memref<288x192xf32, #tpu.memory_space<vmem>>, vector<32x192xf32>
    tpu.vector_store %arg10[%c160, %c0_57], %46 {strides = array<i32>} : memref<288x192xf32, #tpu.memory_space<vmem>>, vector<32x192xf32>,
    %c0_58 = arith.constant 0 : index
    %c32_59 = arith.constant 32 : index
    %48 = vector.load %arg9[%c0_58, %c32_59] : memref<32x232xf32, #tpu.memory_space<vmem>>, vector<32x192xf32>
    %c192 = arith.constant 192 : index
    %c0_60 = arith.constant 0 : index
    %49 = vector.load %arg10[%c192, %c0_60] : memref<288x192xf32, #tpu.memory_space<vmem>>, vector<32x192xf32>
    tpu.vector_store %arg10[%c192, %c0_60], %48 {strides = array<i32>} : memref<288x192xf32, #tpu.memory_space<vmem>>, vector<32x192xf32>,
    %c0_61 = arith.constant 0 : index
    %c33_62 = arith.constant 33 : index
    %50 = vector.load %arg9[%c0_61, %c33_62] : memref<32x232xf32, #tpu.memory_space<vmem>>, vector<32x192xf32>
    %c224 = arith.constant 224 : index
    %c0_63 = arith.constant 0 : index
    %51 = vector.load %arg10[%c224, %c0_63] : memref<288x192xf32, #tpu.memory_space<vmem>>, vector<32x192xf32>
    tpu.vector_store %arg10[%c224, %c0_63], %50 {strides = array<i32>} : memref<288x192xf32, #tpu.memory_space<vmem>>, vector<32x192xf32>,
    %c0_64 = arith.constant 0 : index
    %c34_65 = arith.constant 34 : index
    %52 = vector.load %arg9[%c0_64, %c34_65] : memref<32x232xf32, #tpu.memory_space<vmem>>, vector<32x192xf32>
    %c256 = arith.constant 256 : index
    %c0_66 = arith.constant 0 : index
    %53 = vector.load %arg10[%c256, %c0_66] : memref<288x192xf32, #tpu.memory_space<vmem>>, vector<32x192xf32>
    tpu.vector_store %arg10[%c256, %c0_66], %52 {strides = array<i32>} : memref<288x192xf32, #tpu.memory_space<vmem>>, vector<32x192xf32>,
    %c0_67 = arith.constant 0 : index
    %c0_68 = arith.constant 0 : index
    %54 = vector.load %arg4[%c0_67, %c0_68] : memref<32x288xf32, #tpu.memory_space<vmem>>, vector<32x288xf32>
    %c0_69 = arith.constant 0 : index
    %c0_70 = arith.constant 0 : index
    %55 = vector.load %arg10[%c0_69, %c0_70] : memref<288x192xf32, #tpu.memory_space<vmem>>, vector<288x192xf32>
    %cst_71 = arith.constant dense<0.000000e+00> : vector<32x192xf32>
    %56 = tpu.matmul %54, %55, %cst_71 {dimension_numbers = #tpu.dot_dimension_numbers<[1], [0], [0], [1], [0, 0, 1, 1], [], []>} : vector<32x288xf32>, vector<288x192xf32>, vector<32x192xf32> -> vector<32x192xf32>
    %c0_72 = arith.constant 0 : index
    %c0_73 = arith.constant 0 : index
    %57 = vector.load %arg5[%c0_72, %c0_73] : memref<32x1xf32, #tpu.memory_space<vmem>>, vector<32x1xf32>
    %58 = vector.broadcast %57 : vector<32x1xf32> to vector<32x192xf32>
    %59 = arith.addf %56, %58 : vector<32x192xf32>
    %c0_74 = arith.constant 0 : index
    %c0_75 = arith.constant 0 : index
    %60 = vector.load %arg6[%c0_74, %c0_75] : memref<32x32xf32, #tpu.memory_space<vmem>>, vector<32x32xf32>
    %61 = arith.mulf %59, %59 : vector<32x192xf32>
    %cst_76 = arith.constant dense<0.000000e+00> : vector<32x192xf32>
    %62 = tpu.matmul %60, %61, %cst_76 {dimension_numbers = #tpu.dot_dimension_numbers<[1], [0], [0], [1], [0, 0, 1, 1], [], []>} : vector<32x32xf32>, vector<32x192xf32>, vector<32x192xf32> -> vector<32x192xf32>
    %cst_77 = arith.constant 2.000000e-05 : f32
    %63 = vector.broadcast %cst_77 : f32 to vector<32x192xf32>
    %64 = arith.mulf %63, %62 : vector<32x192xf32>
    %cst_78 = arith.constant 1.000000e+00 : f32
    %65 = vector.broadcast %cst_78 : f32 to vector<32x192xf32>
    %66 = arith.addf %65, %64 : vector<32x192xf32>
    %67 = math.rsqrt %66 : vector<32x192xf32>
    %68 = math.sqrt %67 : vector<32x192xf32>
    %69 = arith.mulf %67, %68 : vector<32x192xf32>
    %70 = arith.mulf %59, %69 : vector<32x192xf32>
    %c0_79 = arith.constant 0 : index
    %c0_80 = arith.constant 0 : index
    %c0_81 = arith.constant 0 : index
    %71 = vector.load %arg7[%c0_79, %c0_80, %c0_81] : memref<1x32x192xf32, #tpu.memory_space<vmem>>, vector<1x32x192xf32>
    %72 = vector.shape_cast %71 : vector<1x32x192xf32> to vector<32x192xf32>
    %73 = vector.shape_cast %70 : vector<32x192xf32> to vector<1x32x192xf32>
    tpu.vector_store %arg7[%c0_79, %c0_80, %c0_81], %73 {strides = array<i32>} : memref<1x32x192xf32, #tpu.memory_space<vmem>>, vector<1x32x192xf32>,
    return
  }
  func.func @transform_0(%arg0: i32) -> (i32, i32, i32) {
    %c0_i32 = arith.constant 0 : i32
    %c0_i32_0 = arith.constant 0 : i32
    %c0_i32_1 = arith.constant 0 : i32
    return %arg0, %c0_i32, %c0_i32_0 : i32, i32, i32
  }
  func.func @transform_1(%arg0: i32) -> (i32, i32) {
    %c0_i32 = arith.constant 0 : i32
    %c0_i32_0 = arith.constant 0 : i32
    %c0_i32_1 = arith.constant 0 : i32
    return %c0_i32, %c0_i32_0 : i32, i32
  }
  func.func @transform_2(%arg0: i32) -> (i32, i32) {
    %c0_i32 = arith.constant 0 : i32
    %c0_i32_0 = arith.constant 0 : i32
    %c0_i32_1 = arith.constant 0 : i32
    return %c0_i32, %c0_i32_0 : i32, i32
  }
  func.func @transform_3(%arg0: i32) -> (i32, i32) {
    %c0_i32 = arith.constant 0 : i32
    %c0_i32_0 = arith.constant 0 : i32
    %c0_i32_1 = arith.constant 0 : i32
    return %c0_i32, %c0_i32_0 : i32, i32
  }
  func.func @transform_4(%arg0: i32) -> (i32, i32) {
    %c0_i32 = arith.constant 0 : i32
    %c0_i32_0 = arith.constant 0 : i32
    %c0_i32_1 = arith.constant 0 : i32
    return %c0_i32, %c0_i32_0 : i32, i32
  }
  func.func @transform_5(%arg0: i32) -> (i32, i32) {
    %c0_i32 = arith.constant 0 : i32
    %c0_i32_0 = arith.constant 0 : i32
    %c0_i32_1 = arith.constant 0 : i32
    return %c0_i32, %c0_i32_0 : i32, i32
  }
  func.func @transform_6(%arg0: i32) -> (i32, i32, i32) {
    %c0_i32 = arith.constant 0 : i32
    %c0_i32_0 = arith.constant 0 : i32
    %c0_i32_1 = arith.constant 0 : i32
    return %arg0, %c0_i32, %c0_i32_0 : i32, i32, i32
  }
}

module attributes {stable_mosaic.version = 11 : i64} {
  func.func @_dcf_kernel(%arg0: i32, %arg1: i32, %arg2: memref<1x32x128xf32, #tpu.memory_space<vmem>>, %arg3: memref<1x32x128xf32, #tpu.memory_space<vmem>>, %arg4: memref<1x32x128xf32, #tpu.memory_space<vmem>>, %arg5: memref<1x32x128xf32, #tpu.memory_space<vmem>>, %arg6: memref<1x1x128xf32, #tpu.memory_space<vmem>>, %arg7: memref<1x1x128xf32, #tpu.memory_space<vmem>>, %arg8: memref<1x1x128xf32, #tpu.memory_space<vmem>>, %arg9: memref<1x1x128xf32, #tpu.memory_space<vmem>>) attributes {dimension_semantics = [#tpu.dimension_semantics<parallel>, #tpu.dimension_semantics<parallel>], iteration_bounds = array<i64: 2, 1>, scalar_prefetch = 0 : i64, scratch_operands = 0 : i64, tpu.core_type = #tpu.core_type<tc>, window_params = [{transform_indices = @transform_0, window_bounds = array<i64: 1, 32, 128>}, {transform_indices = @transform_1, window_bounds = array<i64: 1, 32, 128>}, {transform_indices = @transform_2, window_bounds = array<i64: 1, 32, 128>}, {transform_indices = @transform_3, window_bounds = array<i64: 1, 32, 128>}, {transform_indices = @transform_4, window_bounds = array<i64: 1, 1, 128>}, {transform_indices = @transform_5, window_bounds = array<i64: 1, 1, 128>}, {transform_indices = @transform_6, window_bounds = array<i64: 1, 1, 128>}, {transform_indices = @transform_7, window_bounds = array<i64: 1, 1, 128>}]} {
    %c0 = arith.constant 0 : index
    %c0_0 = arith.constant 0 : index
    %c0_1 = arith.constant 0 : index
    %0 = vector.load %arg2[%c0, %c0_0, %c0_1] : memref<1x32x128xf32, #tpu.memory_space<vmem>>, vector<1x32x128xf32>
    %1 = vector.shape_cast %0 : vector<1x32x128xf32> to vector<32x128xf32>
    %c0_2 = arith.constant 0 : index
    %c0_3 = arith.constant 0 : index
    %c0_4 = arith.constant 0 : index
    %2 = vector.load %arg3[%c0_2, %c0_3, %c0_4] : memref<1x32x128xf32, #tpu.memory_space<vmem>>, vector<1x32x128xf32>
    %3 = vector.shape_cast %2 : vector<1x32x128xf32> to vector<32x128xf32>
    %c0_5 = arith.constant 0 : index
    %c0_6 = arith.constant 0 : index
    %c0_7 = arith.constant 0 : index
    %4 = vector.load %arg4[%c0_5, %c0_6, %c0_7] : memref<1x32x128xf32, #tpu.memory_space<vmem>>, vector<1x32x128xf32>
    %5 = vector.shape_cast %4 : vector<1x32x128xf32> to vector<32x128xf32>
    %c0_8 = arith.constant 0 : index
    %c0_9 = arith.constant 0 : index
    %c0_10 = arith.constant 0 : index
    %6 = vector.load %arg5[%c0_8, %c0_9, %c0_10] : memref<1x32x128xf32, #tpu.memory_space<vmem>>, vector<1x32x128xf32>
    %7 = vector.shape_cast %6 : vector<1x32x128xf32> to vector<32x128xf32>
    %8 = arith.mulf %1, %1 : vector<32x128xf32>
    %9 = arith.mulf %3, %3 : vector<32x128xf32>
    %10 = arith.addf %8, %9 : vector<32x128xf32>
    %cst = arith.constant dense<0.000000e+00> : vector<128xf32>
    %11 = vector.multi_reduction <add>, %10, %cst [0] : vector<32x128xf32> to vector<128xf32>
    %12 = vector.shape_cast %11 : vector<128xf32> to vector<1x128xf32>
    %13 = arith.mulf %5, %1 : vector<32x128xf32>
    %14 = arith.mulf %7, %3 : vector<32x128xf32>
    %15 = arith.addf %13, %14 : vector<32x128xf32>
    %cst_11 = arith.constant dense<0.000000e+00> : vector<128xf32>
    %16 = vector.multi_reduction <add>, %15, %cst_11 [0] : vector<32x128xf32> to vector<128xf32>
    %17 = vector.shape_cast %16 : vector<128xf32> to vector<1x128xf32>
    %18 = arith.mulf %7, %1 : vector<32x128xf32>
    %19 = arith.mulf %5, %3 : vector<32x128xf32>
    %20 = arith.subf %18, %19 : vector<32x128xf32>
    %cst_12 = arith.constant dense<0.000000e+00> : vector<128xf32>
    %21 = vector.multi_reduction <add>, %20, %cst_12 [0] : vector<32x128xf32> to vector<128xf32>
    %22 = vector.shape_cast %21 : vector<128xf32> to vector<1x128xf32>
    %cst_13 = arith.constant 9.99999974E-5 : f32
    %23 = vector.broadcast %cst_13 : f32 to vector<1x128xf32>
    %24 = arith.addf %12, %23 : vector<1x128xf32>
    %25 = tpu.reciprocal %24 : vector<1x128xf32> -> vector<1x128xf32>
    %c0_14 = arith.constant 0 : index
    %c0_15 = arith.constant 0 : index
    %c0_16 = arith.constant 0 : index
    %26 = vector.load %arg6[%c0_14, %c0_15, %c0_16] : memref<1x1x128xf32, #tpu.memory_space<vmem>>, vector<1x1x128xf32>
    %27 = vector.shape_cast %26 : vector<1x1x128xf32> to vector<1x128xf32>
    %28 = arith.mulf %27, %25 : vector<1x128xf32>
    %c0_17 = arith.constant 0 : index
    %c0_18 = arith.constant 0 : index
    %c0_19 = arith.constant 0 : index
    %29 = vector.load %arg7[%c0_17, %c0_18, %c0_19] : memref<1x1x128xf32, #tpu.memory_space<vmem>>, vector<1x1x128xf32>
    %30 = vector.shape_cast %29 : vector<1x1x128xf32> to vector<1x128xf32>
    %31 = arith.mulf %30, %25 : vector<1x128xf32>
    %32 = arith.mulf %17, %28 : vector<1x128xf32>
    %33 = arith.mulf %22, %31 : vector<1x128xf32>
    %34 = arith.subf %32, %33 : vector<1x128xf32>
    %c0_20 = arith.constant 0 : index
    %c0_21 = arith.constant 0 : index
    %c0_22 = arith.constant 0 : index
    %35 = vector.load %arg8[%c0_20, %c0_21, %c0_22] : memref<1x1x128xf32, #tpu.memory_space<vmem>>, vector<1x1x128xf32>
    %36 = vector.shape_cast %35 : vector<1x1x128xf32> to vector<1x128xf32>
    %37 = vector.shape_cast %34 : vector<1x128xf32> to vector<1x1x128xf32>
    tpu.vector_store %arg8[%c0_20, %c0_21, %c0_22], %37 {strides = array<i32>} : memref<1x1x128xf32, #tpu.memory_space<vmem>>, vector<1x1x128xf32>,
    %38 = arith.mulf %17, %31 : vector<1x128xf32>
    %39 = arith.mulf %22, %28 : vector<1x128xf32>
    %40 = arith.addf %38, %39 : vector<1x128xf32>
    %c0_23 = arith.constant 0 : index
    %c0_24 = arith.constant 0 : index
    %c0_25 = arith.constant 0 : index
    %41 = vector.load %arg9[%c0_23, %c0_24, %c0_25] : memref<1x1x128xf32, #tpu.memory_space<vmem>>, vector<1x1x128xf32>
    %42 = vector.shape_cast %41 : vector<1x1x128xf32> to vector<1x128xf32>
    %43 = vector.shape_cast %40 : vector<1x128xf32> to vector<1x1x128xf32>
    tpu.vector_store %arg9[%c0_23, %c0_24, %c0_25], %43 {strides = array<i32>} : memref<1x1x128xf32, #tpu.memory_space<vmem>>, vector<1x1x128xf32>,
    return
  }
  func.func @transform_0(%arg0: i32, %arg1: i32) -> (i32, i32, i32) {
    %c0_i32 = arith.constant 0 : i32
    %c0_i32_0 = arith.constant 0 : i32
    return %arg0, %c0_i32, %arg1 : i32, i32, i32
  }
  func.func @transform_1(%arg0: i32, %arg1: i32) -> (i32, i32, i32) {
    %c0_i32 = arith.constant 0 : i32
    %c0_i32_0 = arith.constant 0 : i32
    return %arg0, %c0_i32, %arg1 : i32, i32, i32
  }
  func.func @transform_2(%arg0: i32, %arg1: i32) -> (i32, i32, i32) {
    %c0_i32 = arith.constant 0 : i32
    %c0_i32_0 = arith.constant 0 : i32
    return %arg0, %c0_i32, %arg1 : i32, i32, i32
  }
  func.func @transform_3(%arg0: i32, %arg1: i32) -> (i32, i32, i32) {
    %c0_i32 = arith.constant 0 : i32
    %c0_i32_0 = arith.constant 0 : i32
    return %arg0, %c0_i32, %arg1 : i32, i32, i32
  }
  func.func @transform_4(%arg0: i32, %arg1: i32) -> (i32, i32, i32) {
    %c0_i32 = arith.constant 0 : i32
    %c0_i32_0 = arith.constant 0 : i32
    %c0_i32_1 = arith.constant 0 : i32
    return %c0_i32, %c0_i32_0, %arg1 : i32, i32, i32
  }
  func.func @transform_5(%arg0: i32, %arg1: i32) -> (i32, i32, i32) {
    %c0_i32 = arith.constant 0 : i32
    %c0_i32_0 = arith.constant 0 : i32
    %c0_i32_1 = arith.constant 0 : i32
    return %c0_i32, %c0_i32_0, %arg1 : i32, i32, i32
  }
  func.func @transform_6(%arg0: i32, %arg1: i32) -> (i32, i32, i32) {
    %c0_i32 = arith.constant 0 : i32
    %c0_i32_0 = arith.constant 0 : i32
    return %arg0, %c0_i32, %arg1 : i32, i32, i32
  }
  func.func @transform_7(%arg0: i32, %arg1: i32) -> (i32, i32, i32) {
    %c0_i32 = arith.constant 0 : i32
    %c0_i32_0 = arith.constant 0 : i32
    return %arg0, %c0_i32, %arg1 : i32, i32, i32
  }
}

</mosaic_0001>

<llo_original>
// kernel: dcfnet_forward.2
$region0: #{dcfnet_forward.2}
  #allocation0 [shape = 'u32[]', space=smem, size = 0x4, offset = 0x4, fixed_abs, tag = 'smem constant byte address 0x4 - core index']
  #allocation1 [shape = 'u32[72,128]{1,0:T(1,128)}', space=vmem, size = 0x9000, scoped, tag = 'internal scratch']
  #allocation2 [shape = 'f32[27,232]{1,0:T(8,128)}', space=vmem, size = 0x8000, scoped, tag = 'scratch operand']
  #allocation3 [shape = 'f32[32,232]{1,0:T(8,128)}', space=vmem, size = 0x8000, scoped, tag = 'scratch operand']
  #allocation4 [shape = 'f32[288,192]{1,0:T(8,128)}', space=vmem, size = 0x48000, scoped, tag = 'scratch operand']
  %s0 = inlined_call_operand.vmem [shape: f32[4,3,272], index: 0, kind: input, shape index: {}]
  %s1 = inlined_call_operand.vmem [shape: f32[32,27], index: 1, kind: input, shape index: {}]
  %s2 = inlined_call_operand.vmem [shape: f32[32,1], index: 2, kind: input, shape index: {}]
  %s3 = inlined_call_operand.vmem [shape: f32[32,288], index: 3, kind: input, shape index: {}]
  %s4 = inlined_call_operand.vmem [shape: f32[32,1], index: 4, kind: input, shape index: {}]
  %s5 = inlined_call_operand.vmem [shape: f32[32,32], index: 5, kind: input, shape index: {}]
  %s6 = inlined_call_operand.vmem [shape: f32[4,32,192], index: 6, kind: output, shape index: {}]
  %s7 = sld [smem:[#allocation0]]
  $region57: #{dcfnet_forward.2} parent=0
    _
  %s9 = ssub.s32 1, %s7
  %s10 = scalar_select 0, %s9, %s7
  loop: start=0, step=1, limit=6
  $region2: #{dcfnet_forward.2} parent=0 // loop_pre_header
    _
  $region3: #{dcfnet_forward.2} parent=0 // loop_header
    %s12 = sphi 0, %s16
    %p13 = scmp.ge.s32.totalorder %s12, 6
    %s22 = sphi 0, %s24
    %s25 = sphi 0, %s22
    %s26 = sphi 0, %s25
    %s42 = sphi 0, %s26
    %s46 = sphi 0, %s46
    %s48 = sphi 0, %s46
    %s49 = sphi 0, %s48
    %s63 = sphi 0, %s49
    %s67 = sphi 0, %s67
    %s69 = sphi 0, %s67
    %s70 = sphi 0, %s69
    %s84 = sphi 0, %s70
    %s88 = sphi 0, %s88
    %s90 = sphi 0, %s88
    %s91 = sphi 0, %s90
    %s105 = sphi 0, %s91
    %s109 = sphi 0, %s109
    %s111 = sphi 0, %s109
    %s112 = sphi 0, %s111
    %s126 = sphi 0, %s112
    %s130 = sphi 0, %s130
    %s132 = sphi 0, %s130
    %s133 = sphi 0, %s132
    %s147 = sphi 0, %s133
    %s153 = sphi 0, %s155
    %s156 = sphi 0, %s153
    %s157 = sphi 0, %s156
    %s173 = sphi 0, %s157
  $region4: #{dcfnet_forward.2} parent=0 // loop_header_branch
    %15 = sbr.rel (%p13) target = $region8
  $region5: #{dcfnet_forward.2} parent=0 // loop_body
    %s17 = ssub.s32 %s12, 1
    %s18 = ssub.s32 %s12, 2
    %s19 = sadd.s32 %s12, 1
    %s20 = ssub.s32 %s12, %s19
    %p21 = scmp.eq.s32.totalorder %s20, 0
    %s23 = sadd.s32 %s22, 1
    %s24 = scalar_select %p21, %s22, %s23
    %p27 = pneg %p21
    %p28 = scmp.eq.s32.totalorder %s12, 3
    %p29 = por %p27, %p28
    %p30 = scmp.ne.s32.totalorder %s22, %s25
    %p31 = scmp.eq.s32.totalorder %s12, 0
    %p32 = por %p30, %p31
    %p33 = scmp.ne.s32.totalorder %s22, %s25
    %p34 = scmp.eq.s32.totalorder %s17, 3
    %p35 = por %p33, %p34
    %p36 = scmp.ne.s32.totalorder %s25, %s26
    %p37 = scmp.eq.s32.totalorder %s17, 0
    %p38 = por %p36, %p37
    %p39 = scmp.ne.s32.totalorder %s25, %s26
    %p40 = scmp.eq.s32.totalorder %s18, 3
    %p41 = por %p39, %p40
    %p43 = scmp.ne.s32.totalorder %s26, %s42
    %p44 = scmp.eq.s32.totalorder %s18, 0
    %p45 = por %p43, %p44
    %s47 = sadd.s32 %s46, 1
    %p50 = scmp.eq.s32.totalorder %s12, 3
    %p51 = scmp.ne.s32.totalorder %s46, %s48
    %p52 = scmp.eq.s32.totalorder %s12, 0
    %p53 = por %p51, %p52
    %p54 = scmp.ne.s32.totalorder %s46, %s48
    %p55 = scmp.eq.s32.totalorder %s17, 3
    %p56 = por %p54, %p55
    %p57 = scmp.ne.s32.totalorder %s48, %s49
    %p58 = scmp.eq.s32.totalorder %s17, 0
    %p59 = por %p57, %p58
    %p60 = scmp.ne.s32.totalorder %s48, %s49
    %p61 = scmp.eq.s32.totalorder %s18, 3
    %p62 = por %p60, %p61
    %p64 = scmp.ne.s32.totalorder %s49, %s63
    %p65 = scmp.eq.s32.totalorder %s18, 0
    %p66 = por %p64, %p65
    %s68 = sadd.s32 %s67, 1
    %p71 = scmp.eq.s32.totalorder %s12, 3
    %p72 = scmp.ne.s32.totalorder %s67, %s69
    %p73 = scmp.eq.s32.totalorder %s12, 0
    %p74 = por %p72, %p73
    %p75 = scmp.ne.s32.totalorder %s67, %s69
    %p76 = scmp.eq.s32.totalorder %s17, 3
    %p77 = por %p75, %p76
    %p78 = scmp.ne.s32.totalorder %s69, %s70
    %p79 = scmp.eq.s32.totalorder %s17, 0
    %p80 = por %p78, %p79
    %p81 = scmp.ne.s32.totalorder %s69, %s70
    %p82 = scmp.eq.s32.totalorder %s18, 3
    %p83 = por %p81, %p82
    %p85 = scmp.ne.s32.totalorder %s70, %s84
    %p86 = scmp.eq.s32.totalorder %s18, 0
    %p87 = por %p85, %p86
    %s89 = sadd.s32 %s88, 1
    %p92 = scmp.eq.s32.totalorder %s12, 3
    %p93 = scmp.ne.s32.totalorder %s88, %s90
    %p94 = scmp.eq.s32.totalorder %s12, 0
    %p95 = por %p93, %p94
    %p96 = scmp.ne.s32.totalorder %s88, %s90
    %p97 = scmp.eq.s32.totalorder %s17, 3
    %p98 = por %p96, %p97
    %p99 = scmp.ne.s32.totalorder %s90, %s91
    %p100 = scmp.eq.s32.totalorder %s17, 0
    %p101 = por %p99, %p100
    %p102 = scmp.ne.s32.totalorder %s90, %s91
    %p103 = scmp.eq.s32.totalorder %s18, 3
    %p104 = por %p102, %p103
    %p106 = scmp.ne.s32.totalorder %s91, %s105
    %p107 = scmp.eq.s32.totalorder %s18, 0
    %p108 = por %p106, %p107
    %s110 = sadd.s32 %s109, 1
    %p113 = scmp.eq.s32.totalorder %s12, 3
    %p114 = scmp.ne.s32.totalorder %s109, %s111
    %p115 = scmp.eq.s32.totalorder %s12, 0
    %p116 = por %p114, %p115
    %p117 = scmp.ne.s32.totalorder %s109, %s111
    %p118 = scmp.eq.s32.totalorder %s17, 3
    %p119 = por %p117, %p118
    %p120 = scmp.ne.s32.totalorder %s111, %s112
    %p121 = scmp.eq.s32.totalorder %s17, 0
    %p122 = por %p120, %p121
    %p123 = scmp.ne.s32.totalorder %s111, %s112
    %p124 = scmp.eq.s32.totalorder %s18, 3
    %p125 = por %p123, %p124
    %p127 = scmp.ne.s32.totalorder %s112, %s126
    %p128 = scmp.eq.s32.totalorder %s18, 0
    %p129 = por %p127, %p128
    %s131 = sadd.s32 %s130, 1
    %p134 = scmp.eq.s32.totalorder %s12, 3
    %p135 = scmp.ne.s32.totalorder %s130, %s132
    %p136 = scmp.eq.s32.totalorder %s12, 0
    %p137 = por %p135, %p136
    %p138 = scmp.ne.s32.totalorder %s130, %s132
    %p139 = scmp.eq.s32.totalorder %s17, 3
    %p140 = por %p138, %p139
    %p141 = scmp.ne.s32.totalorder %s132, %s133
    %p142 = scmp.eq.s32.totalorder %s17, 0
    %p143 = por %p141, %p142
    %p144 = scmp.ne.s32.totalorder %s132, %s133
    %p145 = scmp.eq.s32.totalorder %s18, 3
    %p146 = por %p144, %p145
    %p148 = scmp.ne.s32.totalorder %s133, %s147
    %p149 = scmp.eq.s32.totalorder %s18, 0
    %p150 = por %p148, %p149
    %s151 = ssub.s32 %s12, %s19
    %p152 = scmp.eq.s32.totalorder %s151, 0
    %s154 = sadd.s32 %s153, 1
    %s155 = scalar_select %p152, %s153, %s154
    %p158 = pneg %p152
    %p159 = scmp.eq.s32.totalorder %s12, 3
    %p160 = por %p158, %p159
    %p161 = scmp.ne.s32.totalorder %s153, %s156
    %p162 = scmp.eq.s32.totalorder %s12, 0
    %p163 = por %p161, %p162
    %p164 = scmp.ne.s32.totalorder %s153, %s156
    %p165 = scmp.eq.s32.totalorder %s17, 3
    %p166 = por %p164, %p165
    %p167 = scmp.ne.s32.totalorder %s156, %s157
    %p168 = scmp.eq.s32.totalorder %s17, 0
    %p169 = por %p167, %p168
    %p170 = scmp.ne.s32.totalorder %s156, %s157
    %p171 = scmp.eq.s32.totalorder %s18, 3
    %p172 = por %p170, %p171
    %p174 = scmp.ne.s32.totalorder %s157, %s173
    %p175 = scmp.eq.s32.totalorder %s18, 0
    %p176 = por %p174, %p175
    %p177 = scmp.le.s32.totalorder 1, %s12
    %p178 = scmp.lt.s32.totalorder %s12, 5
    %p179 = pnand %p177, %p178
    %p180 = pneg %p179
    // Predicated region
    $region9: #{dcfnet_forward.2} parent=5 // pred_check
      _
    $region10: #{dcfnet_forward.2} parent=5 // pred_check_branch
      %182 = sbr.rel (%p179) target = $region12
    $region11: #{dcfnet_forward.2} parent=5 // pred_region
      %s183 = ssub.s32 %s12, 1
      // Predicated region
      $region13: #{dcfnet_forward.2} parent=11 // pred_check
        %p184 = pneg %p59
      $region14: #{dcfnet_forward.2} parent=11 // pred_check_branch
        %186 = sbr.rel (%p184) target = $region16
      $region15: #{dcfnet_forward.2} parent=11 // pred_region
        _
      $region16: #{dcfnet_forward.2} parent=11 // pred_fallthru
        _
      // Predicated region
      $region17: #{dcfnet_forward.2} parent=11 // pred_check
        %p187 = pneg %p80
      $region18: #{dcfnet_forward.2} parent=11 // pred_check_branch
        %189 = sbr.rel (%p187) target = $region20
      $region19: #{dcfnet_forward.2} parent=11 // pred_region
        _
      $region20: #{dcfnet_forward.2} parent=11 // pred_fallthru
        _
      // Predicated region
      $region21: #{dcfnet_forward.2} parent=11 // pred_check
        %p190 = pneg %p101
      $region22: #{dcfnet_forward.2} parent=11 // pred_check_branch
        %192 = sbr.rel (%p190) target = $region24
      $region23: #{dcfnet_forward.2} parent=11 // pred_region
        _
      $region24: #{dcfnet_forward.2} parent=11 // pred_fallthru
        _
      // Predicated region
      $region25: #{dcfnet_forward.2} parent=11 // pred_check
        %p193 = pneg %p122
      $region26: #{dcfnet_forward.2} parent=11 // pred_check_branch
        %195 = sbr.rel (%p193) target = $region28
      $region27: #{dcfnet_forward.2} parent=11 // pred_region
        _
      $region28: #{dcfnet_forward.2} parent=11 // pred_fallthru
        _
      // Predicated region
      $region29: #{dcfnet_forward.2} parent=11 // pred_check
        %p196 = pneg %p143
      $region30: #{dcfnet_forward.2} parent=11 // pred_check_branch
        %198 = sbr.rel (%p196) target = $region32
      $region31: #{dcfnet_forward.2} parent=11 // pred_region
        _
      $region32: #{dcfnet_forward.2} parent=11 // pred_fallthru
        _
    $region12: #{dcfnet_forward.2} parent=5 // pred_fallthru
      _
    %p199 = scmp.lt.s32.totalorder %s12, 4
    // Predicated region
    $region33: #{dcfnet_forward.2} parent=5 // pred_check
      %p200 = pneg %p199
    $region34: #{dcfnet_forward.2} parent=5 // pred_check_branch
      %202 = sbr.rel (%p200) target = $region36
    $region35: #{dcfnet_forward.2} parent=5 // pred_region
      // Predicated region
      $region37: #{dcfnet_forward.2} parent=35 // pred_check
        %p203 = pneg %p32
      $region38: #{dcfnet_forward.2} parent=35 // pred_check_branch
        %205 = sbr.rel (%p203) target = $region40
      $region39: #{dcfnet_forward.2} parent=35 // pred_region
        %p206 = scmp.lt.s32.totalorder %s12, 3
        %s207 = scalar_select %p206, %s12, 3
        %s208 = smul.addr %s207, 3
        %s209 = smul.addr %s208, 4
        %s210 = scalar_lea.vmem %s0, %s209
      $region40: #{dcfnet_forward.2} parent=35 // pred_fallthru
        _
    $region36: #{dcfnet_forward.2} parent=5 // pred_fallthru
      _
    %p211 = scmp.le.s32.totalorder 1, %s12
    %p212 = scmp.lt.s32.totalorder %s12, 5
    %p213 = pnand %p211, %p212
    %p214 = pneg %p213
    // Predicated region
    $region41: #{dcfnet_forward.2} parent=5 // pred_check
      _
    $region42: #{dcfnet_forward.2} parent=5 // pred_check_branch
      %216 = sbr.rel (%p213) target = $region44
    $region43: #{dcfnet_forward.2} parent=5 // pred_region
      %s217 = ssub.s32 %s12, 1
      %p218 = scmp.lt.s32.totalorder %s17, 3
      %s219 = scalar_select %p218, %s17, 3
      %s220 = smul.addr %s219, 3
      %s221 = smul.addr %s220, 4
      %s222 = scalar_lea.vmem %s0, %s221
      %p223 = pneg %p38
      %p224 = pneg %p35
      %p225 = pneg %p59
      %p226 = pneg %p56
      %p227 = pneg %p80
      %p228 = pneg %p77
      %p229 = pneg %p101
      %p230 = pneg %p98
      %p231 = pneg %p122
      %p232 = pneg %p119
      %p233 = pneg %p143
      %p234 = pneg %p140
      %p235 = pneg %p169
      %p236 = pneg %p166
      %p237 = scmp.lt.s32.totalorder %s17, 3
      %s238 = scalar_select %p237, %s17, 3
      %s239 = smul.addr %s238, 8
      %s240 = smul.addr %s239, 8
      %s241 = scalar_lea.vmem %s6, %s240
      %p242 = scmp.lt.s32.totalorder %s17, 3
      %s243 = scalar_select %p242, %s17, 3
      %s244 = smul.addr %s243, 3
      %s245 = smul.addr %s244, 4
      %s246 = scalar_lea.vmem %s0, %s245
      %p247 = scmp.lt.s32.totalorder %s17, 3
      %s248 = scalar_select %p247, %s17, 3
      %s249 = smul.addr %s248, 8
      %s250 = smul.addr %s249, 8
      %s251 = scalar_lea.vmem %s6, %s250
      %v252 = vld [vmem:[%s246] sm:$0x77]
      %254 = vst [vmem:[#allocation1] ss:$2 sm:$0xff] %v252
      %v255 = vld.sshfl [vmem:[#allocation1] sm:$0xff pattern:$0x75316420]
      %v256 = vld.sshfl [vmem:[#allocation1 + $0x8] sm:$0xff pattern:$0x75316420]
      %259 = vst [vmem:[#allocation2] sm:$0x7] %v255
      %vm260 = vcmask 845824
      %261 = vst.msk [vmem:[#allocation2 + $0x8] sm:$0x7] %vm260, %v256
      %v262 = vld [vmem:[%s246] sm:$0x77]
      %264 = vst [vmem:[#allocation1] ss:$2 sm:$0xff] %v262
      %v265 = vld.sshfl [vmem:[#allocation1] sm:$0xff pattern:$0x75316420]
      %v266 = vld.sshfl [vmem:[#allocation1 + $0x8] sm:$0xff pattern:$0x75316420]
      %v267 = vrot.slane %v265, 5
      %v268 = vrot.slane %v266, 5
      %269 = vrot.lane.b32.xlu0 %v267, 127
      %v270 = vpop.permute.xlu0 %269
      %271 = vrot.lane.b32.xlu0 %v268, 127
      %v272 = vpop.permute.xlu0 %271
      %vm273 = vcmask 1039360
      %v274 = vsel %vm273, %v270, %v272
      %277 = vst [vmem:[#allocation2] sm:$0x38] %v274
      %vm278 = vcmask 848899
      %279 = vst.msk [vmem:[#allocation2 + $0x8] sm:$0x38] %vm278, %v272
      %v280 = vld [vmem:[%s246] sm:$0x77]
      %282 = vst [vmem:[#allocation1] ss:$2 sm:$0xff] %v280
      %v283 = vld.sshfl [vmem:[#allocation1] sm:$0xff pattern:$0x75316420]
      %v284 = vld.sshfl [vmem:[#allocation1 + $0x8] sm:$0xff pattern:$0x75316420]
      %v285 = vrot.slane %v283, 2
      %v286 = vrot.slane %v284, 2
      %287 = vrot.lane.b32.xlu0 %v285, 126
      %v288 = vpop.permute.xlu0 %287
      %289 = vrot.lane.b32.xlu0 %v286, 126
      %v290 = vpop.permute.xlu0 %289
      %vm291 = vcmask 1031168
      %v292 = vsel %vm291, %v288, %v290
      %295 = vst [vmem:[#allocation2] sm:$0xc0] %v292
      %vm296 = vcmask 850950
      %297 = vst.msk [vmem:[#allocation2 + $0x8] sm:$0xc0] %vm296, %v290
      %298 = vst [vmem:[#allocation2 + $0x10] sm:$0x1] %v292
      %vm299 = vcmask 843776
      %300 = vst.msk [vmem:[#allocation2 + $0x18] sm:$0x1] %vm299, %v290
      %v301 = vld [vmem:[%s246] sm:$0x77]
      %303 = vst [vmem:[#allocation1] ss:$2 sm:$0xff] %v301
      %v304 = vld.sshfl [vmem:[#allocation1] sm:$0xff pattern:$0x75316420]
      %v305 = vld.sshfl [vmem:[#allocation1 + $0x8] sm:$0xff pattern:$0x75316420]
      %v306 = vrot.slane %v304, 7
      %v307 = vrot.slane %v305, 7
      %308 = vrot.lane.b32.xlu0 %v306, 112
      %v309 = vpop.permute.xlu0 %308
      %310 = vrot.lane.b32.xlu0 %v307, 112
      %v311 = vpop.permute.xlu0 %310
      %vm312 = vcmask 916480
      %v313 = vsel %vm312, %v309, %v311
      %316 = vst [vmem:[#allocation2 + $0x10] sm:$0xe] %v313
      %vm317 = vcmask 846849
      %318 = vst.msk [vmem:[#allocation2 + $0x18] sm:$0xe] %vm317, %v311
      %v319 = vld [vmem:[%s246] sm:$0x77]
      %s321 = scalar_lea.vmem [#allocation1], 1
      %322 = vst [vmem:[%s321] ss:$2 sm:$0xff] %v319
      %v323 = vld.sshfl [vmem:[#allocation1] sm:$0xff pattern:$0x75316420]
      %v324 = vld.sshfl [vmem:[#allocation1 + $0x8] sm:$0xff pattern:$0x75316420]
      %325 = vrot.lane.b32.xlu0 %v323, 111
      %v326 = vpop.permute.xlu0 %325
      %327 = vrot.lane.b32.xlu0 %v324, 111
      %v328 = vpop.permute.xlu0 %327
      %vm329 = vcmask 908288
      %v330 = vsel %vm329, %v326, %v328
      %333 = vst [vmem:[#allocation2 + $0x10] sm:$0x70] %v330
      %vm334 = vcmask 849924
      %335 = vst.msk [vmem:[#allocation2 + $0x18] sm:$0x70] %vm334, %v328
      %v336 = vld [vmem:[%s246] sm:$0x77]
      %338 = vst [vmem:[#allocation1] ss:$2 sm:$0xff] %v336
      %v339 = vld.sshfl [vmem:[#allocation1] sm:$0xff pattern:$0x75316420]
      %v340 = vld.sshfl [vmem:[#allocation1 + $0x8] sm:$0xff pattern:$0x75316420]
      %v341 = vrot.slane %v339, 1
      %v342 = vrot.slane %v340, 1
      %343 = vrot.lane.b32.xlu0 %v341, 110
      %v344 = vpop.permute.xlu0 %343
      %345 = vrot.lane.b32.xlu0 %v342, 110
      %v346 = vpop.permute.xlu0 %345
      %vm347 = vcmask 900096
      %v348 = vsel %vm347, %v344, %v346
      %351 = vst [vmem:[#allocation2 + $0x10] sm:$0x80] %v348
      %vm352 = vcmask 850951
      %353 = vst.msk [vmem:[#allocation2 + $0x18] sm:$0x80] %vm352, %v346
      %354 = vst [vmem:[#allocation2 + $0x20] sm:$0x3] %v348
      %vm355 = vcmask 844800
      %356 = vst.msk [vmem:[#allocation2 + $0x28] sm:$0x3] %vm355, %v346
      %v357 = vld [vmem:[%s246] sm:$0x77]
      %v358 = vld [vmem:[%s246 + $0x8] sm:$0x7]
      %361 = vst [vmem:[#allocation1] ss:$2 sm:$0xff] %v357
      %s362 = scalar_lea.vmem [#allocation1], 16
      %363 = vst [vmem:[%s362] ss:$2 sm:$0xff] %v358
      %v364 = vld.sshfl [vmem:[#allocation1] sm:$0xff pattern:$0x75316420]
      %v365 = vld.sshfl [vmem:[#allocation1 + $0x8] sm:$0xff pattern:$0x75316420]
      %v366 = vld.sshfl [vmem:[#allocation1 + $0x10] sm:$0xff pattern:$0x75316420]
      %v367 = vrot.slane %v364, 6
      %v368 = vrot.slane %v365, 6
      %v369 = vrot.slane %v366, 6
      %370 = vrot.lane.b32.xlu0 %v367, 96
      %v371 = vpop.permute.xlu0 %370
      %372 = vrot.lane.b32.xlu0 %v368, 96
      %v373 = vpop.permute.xlu0 %372
      %374 = vrot.lane.b32.xlu0 %v369, 96
      %v375 = vpop.permute.xlu0 %374
      %vm376 = vcmask 785408
      %v377 = vsel %vm376, %v371, %v373
      %v378 = vsel %vm376, %v373, %v375
      %381 = vst [vmem:[#allocation2 + $0x20] sm:$0x1c] %v377
      %vm382 = vcmask 847874
      %383 = vst.msk [vmem:[#allocation2 + $0x28] sm:$0x1c] %vm382, %v378
      %v384 = vld [vmem:[%s246] sm:$0x77]
      %v385 = vld [vmem:[%s246 + $0x8] sm:$0x7]
      %388 = vst [vmem:[#allocation1] ss:$2 sm:$0xff] %v384
      %s389 = scalar_lea.vmem [#allocation1], 16
      %390 = vst [vmem:[%s389] ss:$2 sm:$0xff] %v385
      %v391 = vld.sshfl [vmem:[#allocation1] sm:$0xff pattern:$0x75316420]
      %v392 = vld.sshfl [vmem:[#allocation1 + $0x8] sm:$0xff pattern:$0x75316420]
      %v393 = vld.sshfl [vmem:[#allocation1 + $0x10] sm:$0xff pattern:$0x75316420]
      %v394 = vrot.slane %v391, 3
      %v395 = vrot.slane %v392, 3
      %v396 = vrot.slane %v393, 3
      %397 = vrot.lane.b32.xlu0 %v394, 95
      %v398 = vpop.permute.xlu0 %397
      %399 = vrot.lane.b32.xlu0 %v395, 95
      %v400 = vpop.permute.xlu0 %399
      %401 = vrot.lane.b32.xlu0 %v396, 95
      %v402 = vpop.permute.xlu0 %401
      %vm403 = vcmask 777216
      %v404 = vsel %vm403, %v398, %v400
      %v405 = vsel %vm403, %v400, %v402
      %408 = vst [vmem:[#allocation2 + $0x20] sm:$0xe0] %v404
      %vm409 = vcmask 850949
      %410 = vst.msk [vmem:[#allocation2 + $0x28] sm:$0xe0] %vm409, %v405
      %v411 = vld [vmem:[%s246] sm:$0x77]
      %v412 = vld [vmem:[%s246 + $0x8] sm:$0x7]
      %415 = vst [vmem:[#allocation1] ss:$2 sm:$0xff] %v411
      %s416 = scalar_lea.vmem [#allocation1], 16
      %417 = vst [vmem:[%s416] ss:$2 sm:$0xff] %v412
      %v418 = vld.sshfl [vmem:[#allocation1] sm:$0xff pattern:$0x75316420]
      %v419 = vld.sshfl [vmem:[#allocation1 + $0x8] sm:$0xff pattern:$0x75316420]
      %v420 = vld.sshfl [vmem:[#allocation1 + $0x10] sm:$0xff pattern:$0x75316420]
      %421 = vrot.lane.b32.xlu0 %v418, 94
      %v422 = vpop.permute.xlu0 %421
      %423 = vrot.lane.b32.xlu0 %v419, 94
      %v424 = vpop.permute.xlu0 %423
      %425 = vrot.lane.b32.xlu0 %v420, 94
      %v426 = vpop.permute.xlu0 %425
      %vm427 = vcmask 769024
      %v428 = vsel %vm427, %v422, %v424
      %v429 = vsel %vm427, %v424, %v426
      %432 = vst [vmem:[#allocation2 + $0x30] sm:$0x7] %v428
      %433 = vst.msk [vmem:[#allocation2 + $0x38] sm:$0x7] %vm260, %v429
      %v434 = vld [vmem:[%s1] sm:$0xff]
      %v435 = vld [vmem:[%s1 + $0x8] sm:$0xff]
      %v436 = vld [vmem:[%s1 + $0x10] sm:$0xff]
      %v437 = vld [vmem:[%s1 + $0x18] sm:$0xff]
      %v438 = vld [vmem:[#allocation2] sm:$0xff]
      %v439 = vld [vmem:[#allocation2 + $0x8] sm:$0xff]
      %v440 = vld [vmem:[#allocation2 + $0x10] sm:$0xff]
      %v441 = vld [vmem:[#allocation2 + $0x18] sm:$0xff]
      %v442 = vld [vmem:[#allocation2 + $0x20] sm:$0xff]
      %v443 = vld [vmem:[#allocation2 + $0x28] sm:$0xff]
      %v444 = vld [vmem:[#allocation2 + $0x30] sm:$0x7]
      %v445 = vld [vmem:[#allocation2 + $0x38] sm:$0x7]
      %v446 = vld [vmem:[%s2] sm:$0xff]
      %v447 = vld [vmem:[%s2 + $0x8] sm:$0xff]
      %v448 = vld [vmem:[%s2 + $0x10] sm:$0xff]
      %v449 = vld [vmem:[%s2 + $0x18] sm:$0xff]
      %451 = vset.pattern.permute.xlu0 0
      %452 = vperm.xlu0 %451, %v446
      %v453 = vpop.permute.xlu0 %452
      %456 = vset.pattern.permute.xlu0 0
      %457 = vperm.xlu0 %456, %v447
      %v458 = vpop.permute.xlu0 %457
      %461 = vset.pattern.permute.xlu0 0
      %462 = vperm.xlu0 %461, %v448
      %v463 = vpop.permute.xlu0 %462
      %466 = vset.pattern.permute.xlu0 0
      %467 = vperm.xlu0 %466, %v449
      %v468 = vpop.permute.xlu0 %467
      %vm470 = vcmask 220160
      %v472 = vsel %vm470, %v434, 0
      %v475 = vsel %vm470, %v435, 0
      %v478 = vsel %vm470, %v436, 0
      %v481 = vsel %vm470, %v437, 0
      %vm483 = vcmask 1042432
      %v485 = vsel %vm483, %v444, 0
      %v488 = vsel %vm483, %v445, 0
      %490 = vmatpush.msra.mxu0 0.0
      %491 = vmatpush.msra.mxu0 0.0
      %492 = vmatpush.msra.mxu0 0.0
      %493 = vmatpush.msra.mxu0 0.0
      %494 = vmatpush.msra.mxu0 0.0
      %495 = vmatpush.msra.mxu0 0.0
      %496 = vmatpush.msra.mxu0 0.0
      %497 = vmatpush.msra.mxu0 0.0
      %498 = vmatpush.msra.mxu0 0.0
      %499 = vmatpush.msra.mxu0 0.0
      %500 = vmatpush.msra.mxu0 0.0
      %501 = vmatpush.msra.mxu0 0.0
      %502 = vmatpush.msra.mxu0 %v485
      %503 = vmatpush.msra.mxu0 %v442
      %504 = vmatpush.msra.mxu0 %v440
      %505 = vmatpush.msra.mxu0 %v438
      %506 = vmatmul.f32.gmra.mxu0 %v472
      %v507 = vpop.f32.mrf.mxu0
      %v508 = vadd.f32 %v453, %v507
      %509 = vmatmul.f32.gmra.mxu0 %v475
      %v510 = vpop.f32.mrf.mxu0
      %v511 = vadd.f32 %v458, %v510
      %512 = vmatmul.f32.gmra.mxu0 %v478
      %v513 = vpop.f32.mrf.mxu0
      %v514 = vadd.f32 %v463, %v513
      %515 = vmatmul.f32.gmra.mxu0 %v481
      %v516 = vpop.f32.mrf.mxu0
      %v517 = vadd.f32 %v468, %v516
      %518 = vdwg.mxu0
      %519 = vmatpush.msra.mxu0 0.0
      %520 = vmatpush.msra.mxu0 0.0
      %521 = vmatpush.msra.mxu0 0.0
      %522 = vmatpush.msra.mxu0 0.0
      %523 = vmatpush.msra.mxu0 0.0
      %524 = vmatpush.msra.mxu0 0.0
      %525 = vmatpush.msra.mxu0 0.0
      %526 = vmatpush.msra.mxu0 0.0
      %527 = vmatpush.msra.mxu0 0.0
      %528 = vmatpush.msra.mxu0 0.0
      %529 = vmatpush.msra.mxu0 0.0
      %530 = vmatpush.msra.mxu0 0.0
      %531 = vmatpush.msra.mxu0 %v488
      %532 = vmatpush.msra.mxu0 %v443
      %533 = vmatpush.msra.mxu0 %v441
      %534 = vmatpush.msra.mxu0 %v439
      %535 = vmatmul.f32.gmra.mxu0 %v472
      %v536 = vpop.f32.mrf.mxu0
      %v537 = vadd.f32 %v453, %v536
      %538 = vmatmul.f32.gmra.mxu0 %v475
      %v539 = vpop.f32.mrf.mxu0
      %v540 = vadd.f32 %v458, %v539
      %541 = vmatmul.f32.gmra.mxu0 %v478
      %v542 = vpop.f32.mrf.mxu0
      %v543 = vadd.f32 %v463, %v542
      %544 = vmatmul.f32.gmra.mxu0 %v481
      %v545 = vpop.f32.mrf.mxu0
      %v546 = vadd.f32 %v468, %v545
      %547 = vdwg.mxu0
      %v548 = vmax.f32 %v508, 0.0
      %v549 = vmax.f32 %v537, 0.0
      %v550 = vmax.f32 %v511, 0.0
      %v551 = vmax.f32 %v540, 0.0
      %v552 = vmax.f32 %v514, 0.0
      %v553 = vmax.f32 %v543, 0.0
      %v554 = vmax.f32 %v517, 0.0
      %v555 = vmax.f32 %v546, 0.0
      %556 = vst [vmem:[#allocation3] sm:$0xff] %v548
      %vm557 = vcmask 850944
      %558 = vst.msk [vmem:[#allocation3 + $0x8] sm:$0xff] %vm557, %v549
      %559 = vst [vmem:[#allocation3 + $0x10] sm:$0xff] %v550
      %560 = vst.msk [vmem:[#allocation3 + $0x18] sm:$0xff] %vm557, %v551
      %561 = vst [vmem:[#allocation3 + $0x20] sm:$0xff] %v552
      %562 = vst.msk [vmem:[#allocation3 + $0x28] sm:$0xff] %vm557, %v553
      %563 = vst [vmem:[#allocation3 + $0x30] sm:$0xff] %v554
      %564 = vst.msk [vmem:[#allocation3 + $0x38] sm:$0xff] %vm557, %v555
      %v565 = vld [vmem:[#allocation3] sm:$0xff]
      %v566 = vld [vmem:[#allocation3 + $0x8] sm:$0xff]
      %v567 = vld [vmem:[#allocation3 + $0x10] sm:$0xff]
      %v568 = vld [vmem:[#allocation3 + $0x18] sm:$0xff]
      %v569 = vld [vmem:[#allocation3 + $0x20] sm:$0xff]
      %v570 = vld [vmem:[#allocation3 + $0x28] sm:$0xff]
      %v571 = vld [vmem:[#allocation3 + $0x30] sm:$0xff]
      %v572 = vld [vmem:[#allocation3 + $0x38] sm:$0xff]
      %573 = vst [vmem:[#allocation4] sm:$0xff] %v565
      %vm574 = vcmask 523264
      %575 = vst.msk [vmem:[#allocation4 + $0x8] sm:$0xff] %vm574, %v566
      %576 = vst [vmem:[#allocation4 + $0x10] sm:$0xff] %v567
      %577 = vst.msk [vmem:[#allocation4 + $0x18] sm:$0xff] %vm574, %v568
      %578 = vst [vmem:[#allocation4 + $0x20] sm:$0xff] %v569
      %579 = vst.msk [vmem:[#allocation4 + $0x28] sm:$0xff] %vm574, %v570
      %580 = vst [vmem:[#allocation4 + $0x30] sm:$0xff] %v571
      %581 = vst.msk [vmem:[#allocation4 + $0x38] sm:$0xff] %vm574, %v572
      %v582 = vld [vmem:[#allocation3] sm:$0xff]
      %v583 = vld [vmem:[#allocation3 + $0x8] sm:$0xff]
      %v584 = vld [vmem:[#allocation3 + $0x10] sm:$0xff]
      %v585 = vld [vmem:[#allocation3 + $0x18] sm:$0xff]
      %v586 = vld [vmem:[#allocation3 + $0x20] sm:$0xff]
      %v587 = vld [vmem:[#allocation3 + $0x28] sm:$0xff]
      %v588 = vld [vmem:[#allocation3 + $0x30] sm:$0xff]
      %v589 = vld [vmem:[#allocation3 + $0x38] sm:$0xff]
      %598 = vrot.lane.b32.xlu0 %v582, 127
      %v599 = vpop.permute.xlu0 %598
      %600 = vrot.lane.b32.xlu0 %v583, 127
      %v601 = vpop.permute.xlu0 %600
      %602 = vrot.lane.b32.xlu0 %v584, 127
      %v603 = vpop.permute.xlu0 %602
      %604 = vrot.lane.b32.xlu0 %v585, 127
      %v605 = vpop.permute.xlu0 %604
      %606 = vrot.lane.b32.xlu0 %v586, 127
      %v607 = vpop.permute.xlu0 %606
      %608 = vrot.lane.b32.xlu0 %v587, 127
      %v609 = vpop.permute.xlu0 %608
      %610 = vrot.lane.b32.xlu0 %v588, 127
      %v611 = vpop.permute.xlu0 %610
      %612 = vrot.lane.b32.xlu0 %v589, 127
      %v613 = vpop.permute.xlu0 %612
      %v614 = vsel %vm273, %v599, %v601
      %v615 = vsel %vm273, %v603, %v605
      %v616 = vsel %vm273, %v607, %v609
      %v617 = vsel %vm273, %v611, %v613
      %626 = vst [vmem:[#allocation4 + $0x40] sm:$0xff] %v614
      %627 = vst.msk [vmem:[#allocation4 + $0x48] sm:$0xff] %vm574, %v601
      %628 = vst [vmem:[#allocation4 + $0x50] sm:$0xff] %v615
      %629 = vst.msk [vmem:[#allocation4 + $0x58] sm:$0xff] %vm574, %v605
      %630 = vst [vmem:[#allocation4 + $0x60] sm:$0xff] %v616
      %631 = vst.msk [vmem:[#allocation4 + $0x68] sm:$0xff] %vm574, %v609
      %632 = vst [vmem:[#allocation4 + $0x70] sm:$0xff] %v617
      %633 = vst.msk [vmem:[#allocation4 + $0x78] sm:$0xff] %vm574, %v613
      %v634 = vld [vmem:[#allocation3] sm:$0xff]
      %v635 = vld [vmem:[#allocation3 + $0x8] sm:$0xff]
      %v636 = vld [vmem:[#allocation3 + $0x10] sm:$0xff]
      %v637 = vld [vmem:[#allocation3 + $0x18] sm:$0xff]
      %v638 = vld [vmem:[#allocation3 + $0x20] sm:$0xff]
      %v639 = vld [vmem:[#allocation3 + $0x28] sm:$0xff]
      %v640 = vld [vmem:[#allocation3 + $0x30] sm:$0xff]
      %v641 = vld [vmem:[#allocation3 + $0x38] sm:$0xff]
      %650 = vrot.lane.b32.xlu0 %v634, 126
      %v651 = vpop.permute.xlu0 %650
      %652 = vrot.lane.b32.xlu0 %v635, 126
      %v653 = vpop.permute.xlu0 %652
      %654 = vrot.lane.b32.xlu0 %v636, 126
      %v655 = vpop.permute.xlu0 %654
      %656 = vrot.lane.b32.xlu0 %v637, 126
      %v657 = vpop.permute.xlu0 %656
      %658 = vrot.lane.b32.xlu0 %v638, 126
      %v659 = vpop.permute.xlu0 %658
      %660 = vrot.lane.b32.xlu0 %v639, 126
      %v661 = vpop.permute.xlu0 %660
      %662 = vrot.lane.b32.xlu0 %v640, 126
      %v663 = vpop.permute.xlu0 %662
      %664 = vrot.lane.b32.xlu0 %v641, 126
      %v665 = vpop.permute.xlu0 %664
      %v666 = vsel %vm291, %v651, %v653
      %v667 = vsel %vm291, %v655, %v657
      %v668 = vsel %vm291, %v659, %v661
      %v669 = vsel %vm291, %v663, %v665
      %678 = vst [vmem:[#allocation4 + $0x80] sm:$0xff] %v666
      %679 = vst.msk [vmem:[#allocation4 + $0x88] sm:$0xff] %vm574, %v653
      %680 = vst [vmem:[#allocation4 + $0x90] sm:$0xff] %v667
      %681 = vst.msk [vmem:[#allocation4 + $0x98] sm:$0xff] %vm574, %v657
      %682 = vst [vmem:[#allocation4 + $0xa0] sm:$0xff] %v668
      %683 = vst.msk [vmem:[#allocation4 + $0xa8] sm:$0xff] %vm574, %v661
      %684 = vst [vmem:[#allocation4 + $0xb0] sm:$0xff] %v669
      %685 = vst.msk [vmem:[#allocation4 + $0xb8] sm:$0xff] %vm574, %v665
      %v686 = vld [vmem:[#allocation3] sm:$0xff]
      %v687 = vld [vmem:[#allocation3 + $0x8] sm:$0xff]
      %v688 = vld [vmem:[#allocation3 + $0x10] sm:$0xff]
      %v689 = vld [vmem:[#allocation3 + $0x18] sm:$0xff]
      %v690 = vld [vmem:[#allocation3 + $0x20] sm:$0xff]
      %v691 = vld [vmem:[#allocation3 + $0x28] sm:$0xff]
      %v692 = vld [vmem:[#allocation3 + $0x30] sm:$0xff]
      %v693 = vld [vmem:[#allocation3 + $0x38] sm:$0xff]
      %702 = vrot.lane.b32.xlu0 %v686, 112
      %v703 = vpop.permute.xlu0 %702
      %704 = vrot.lane.b32.xlu0 %v687, 112
      %v705 = vpop.permute.xlu0 %704
      %706 = vrot.lane.b32.xlu0 %v688, 112
      %v707 = vpop.permute.xlu0 %706
      %708 = vrot.lane.b32.xlu0 %v689, 112
      %v709 = vpop.permute.xlu0 %708
      %710 = vrot.lane.b32.xlu0 %v690, 112
      %v711 = vpop.permute.xlu0 %710
      %712 = vrot.lane.b32.xlu0 %v691, 112
      %v713 = vpop.permute.xlu0 %712
      %714 = vrot.lane.b32.xlu0 %v692, 112
      %v715 = vpop.permute.xlu0 %714
      %716 = vrot.lane.b32.xlu0 %v693, 112
      %v717 = vpop.permute.xlu0 %716
      %v718 = vsel %vm312, %v703, %v705
      %v719 = vsel %vm312, %v707, %v709
      %v720 = vsel %vm312, %v711, %v713
      %v721 = vsel %vm312, %v715, %v717
      %730 = vst [vmem:[#allocation4 + $0xc0] sm:$0xff] %v718
      %731 = vst.msk [vmem:[#allocation4 + $0xc8] sm:$0xff] %vm574, %v705
      %732 = vst [vmem:[#allocation4 + $0xd0] sm:$0xff] %v719
      %733 = vst.msk [vmem:[#allocation4 + $0xd8] sm:$0xff] %vm574, %v709
      %734 = vst [vmem:[#allocation4 + $0xe0] sm:$0xff] %v720
      %735 = vst.msk [vmem:[#allocation4 + $0xe8] sm:$0xff] %vm574, %v713
      %736 = vst [vmem:[#allocation4 + $0xf0] sm:$0xff] %v721
      %737 = vst.msk [vmem:[#allocation4 + $0xf8] sm:$0xff] %vm574, %v717
      %v738 = vld [vmem:[#allocation3] sm:$0xff]
      %v739 = vld [vmem:[#allocation3 + $0x8] sm:$0xff]
      %v740 = vld [vmem:[#allocation3 + $0x10] sm:$0xff]
      %v741 = vld [vmem:[#allocation3 + $0x18] sm:$0xff]
      %v742 = vld [vmem:[#allocation3 + $0x20] sm:$0xff]
      %v743 = vld [vmem:[#allocation3 + $0x28] sm:$0xff]
      %v744 = vld [vmem:[#allocation3 + $0x30] sm:$0xff]
      %v745 = vld [vmem:[#allocation3 + $0x38] sm:$0xff]
      %754 = vrot.lane.b32.xlu0 %v738, 111
      %v755 = vpop.permute.xlu0 %754
      %756 = vrot.lane.b32.xlu0 %v739, 111
      %v757 = vpop.permute.xlu0 %756
      %758 = vrot.lane.b32.xlu0 %v740, 111
      %v759 = vpop.permute.xlu0 %758
      %760 = vrot.lane.b32.xlu0 %v741, 111
      %v761 = vpop.permute.xlu0 %760
      %762 = vrot.lane.b32.xlu0 %v742, 111
      %v763 = vpop.permute.xlu0 %762
      %764 = vrot.lane.b32.xlu0 %v743, 111
      %v765 = vpop.permute.xlu0 %764
      %766 = vrot.lane.b32.xlu0 %v744, 111
      %v767 = vpop.permute.xlu0 %766
      %768 = vrot.lane.b32.xlu0 %v745, 111
      %v769 = vpop.permute.xlu0 %768
      %v770 = vsel %vm329, %v755, %v757
      %v771 = vsel %vm329, %v759, %v761
      %v772 = vsel %vm329, %v763, %v765
      %v773 = vsel %vm329, %v767, %v769
      %782 = vst [vmem:[#allocation4 + $0x100] sm:$0xff] %v770
      %783 = vst.msk [vmem:[#allocation4 + $0x108] sm:$0xff] %vm574, %v757
      %784 = vst [vmem:[#allocation4 + $0x110] sm:$0xff] %v771
      %785 = vst.msk [vmem:[#allocation4 + $0x118] sm:$0xff] %vm574, %v761
      %786 = vst [vmem:[#allocation4 + $0x120] sm:$0xff] %v772
      %787 = vst.msk [vmem:[#allocation4 + $0x128] sm:$0xff] %vm574, %v765
      %788 = vst [vmem:[#allocation4 + $0x130] sm:$0xff] %v773
      %789 = vst.msk [vmem:[#allocation4 + $0x138] sm:$0xff] %vm574, %v769
      %v790 = vld [vmem:[#allocation3] sm:$0xff]
      %v791 = vld [vmem:[#allocation3 + $0x8] sm:$0xff]
      %v792 = vld [vmem:[#allocation3 + $0x10] sm:$0xff]
      %v793 = vld [vmem:[#allocation3 + $0x18] sm:$0xff]
      %v794 = vld [vmem:[#allocation3 + $0x20] sm:$0xff]
      %v795 = vld [vmem:[#allocation3 + $0x28] sm:$0xff]
      %v796 = vld [vmem:[#allocation3 + $0x30] sm:$0xff]
      %v797 = vld [vmem:[#allocation3 + $0x38] sm:$0xff]
      %806 = vrot.lane.b32.xlu0 %v790, 110
      %v807 = vpop.permute.xlu0 %806
      %808 = vrot.lane.b32.xlu0 %v791, 110
      %v809 = vpop.permute.xlu0 %808
      %810 = vrot.lane.b32.xlu0 %v792, 110
      %v811 = vpop.permute.xlu0 %810
      %812 = vrot.lane.b32.xlu0 %v793, 110
      %v813 = vpop.permute.xlu0 %812
      %814 = vrot.lane.b32.xlu0 %v794, 110
      %v815 = vpop.permute.xlu0 %814
      %816 = vrot.lane.b32.xlu0 %v795, 110
      %v817 = vpop.permute.xlu0 %816
      %818 = vrot.lane.b32.xlu0 %v796, 110
      %v819 = vpop.permute.xlu0 %818
      %820 = vrot.lane.b32.xlu0 %v797, 110
      %v821 = vpop.permute.xlu0 %820
      %v822 = vsel %vm347, %v807, %v809
      %v823 = vsel %vm347, %v811, %v813
      %v824 = vsel %vm347, %v815, %v817
      %v825 = vsel %vm347, %v819, %v821
      %834 = vst [vmem:[#allocation4 + $0x140] sm:$0xff] %v822
      %835 = vst.msk [vmem:[#allocation4 + $0x148] sm:$0xff] %vm574, %v809
      %836 = vst [vmem:[#allocation4 + $0x150] sm:$0xff] %v823
      %837 = vst.msk [vmem:[#allocation4 + $0x158] sm:$0xff] %vm574, %v813
      %838 = vst [vmem:[#allocation4 + $0x160] sm:$0xff] %v824
      %839 = vst.msk [vmem:[#allocation4 + $0x168] sm:$0xff] %vm574, %v817
      %840 = vst [vmem:[#allocation4 + $0x170] sm:$0xff] %v825
      %841 = vst.msk [vmem:[#allocation4 + $0x178] sm:$0xff] %vm574, %v821
      %v842 = vld [vmem:[#allocation3] sm:$0xff]
      %v843 = vld [vmem:[#allocation3 + $0x8] sm:$0xff]
      %v844 = vld [vmem:[#allocation3 + $0x10] sm:$0xff]
      %v845 = vld [vmem:[#allocation3 + $0x18] sm:$0xff]
      %v846 = vld [vmem:[#allocation3 + $0x20] sm:$0xff]
      %v847 = vld [vmem:[#allocation3 + $0x28] sm:$0xff]
      %v848 = vld [vmem:[#allocation3 + $0x30] sm:$0xff]
      %v849 = vld [vmem:[#allocation3 + $0x38] sm:$0xff]
      %858 = vrot.lane.b32.xlu0 %v842, 96
      %v859 = vpop.permute.xlu0 %858
      %860 = vrot.lane.b32.xlu0 %v843, 96
      %v861 = vpop.permute.xlu0 %860
      %862 = vrot.lane.b32.xlu0 %v844, 96
      %v863 = vpop.permute.xlu0 %862
      %864 = vrot.lane.b32.xlu0 %v845, 96
      %v865 = vpop.permute.xlu0 %864
      %866 = vrot.lane.b32.xlu0 %v846, 96
      %v867 = vpop.permute.xlu0 %866
      %868 = vrot.lane.b32.xlu0 %v847, 96
      %v869 = vpop.permute.xlu0 %868
      %870 = vrot.lane.b32.xlu0 %v848, 96
      %v871 = vpop.permute.xlu0 %870
      %872 = vrot.lane.b32.xlu0 %v849, 96
      %v873 = vpop.permute.xlu0 %872
      %v874 = vsel %vm376, %v859, %v861
      %v875 = vsel %vm376, %v863, %v865
      %v876 = vsel %vm376, %v867, %v869
      %v877 = vsel %vm376, %v871, %v873
      %886 = vst [vmem:[#allocation4 + $0x180] sm:$0xff] %v874
      %887 = vst.msk [vmem:[#allocation4 + $0x188] sm:$0xff] %vm574, %v861
      %888 = vst [vmem:[#allocation4 + $0x190] sm:$0xff] %v875
      %889 = vst.msk [vmem:[#allocation4 + $0x198] sm:$0xff] %vm574, %v865
      %890 = vst [vmem:[#allocation4 + $0x1a0] sm:$0xff] %v876
      %891 = vst.msk [vmem:[#allocation4 + $0x1a8] sm:$0xff] %vm574, %v869
      %892 = vst [vmem:[#allocation4 + $0x1b0] sm:$0xff] %v877
      %893 = vst.msk [vmem:[#allocation4 + $0x1b8] sm:$0xff] %vm574, %v873
      %v894 = vld [vmem:[#allocation3] sm:$0xff]
      %v895 = vld [vmem:[#allocation3 + $0x8] sm:$0xff]
      %v896 = vld [vmem:[#allocation3 + $0x10] sm:$0xff]
      %v897 = vld [vmem:[#allocation3 + $0x18] sm:$0xff]
      %v898 = vld [vmem:[#allocation3 + $0x20] sm:$0xff]
      %v899 = vld [vmem:[#allocation3 + $0x28] sm:$0xff]
      %v900 = vld [vmem:[#allocation3 + $0x30] sm:$0xff]
      %v901 = vld [vmem:[#allocation3 + $0x38] sm:$0xff]
      %910 = vrot.lane.b32.xlu0 %v894, 95
      %v911 = vpop.permute.xlu0 %910
      %912 = vrot.lane.b32.xlu0 %v895, 95
      %v913 = vpop.permute.xlu0 %912
      %914 = vrot.lane.b32.xlu0 %v896, 95
      %v915 = vpop.permute.xlu0 %914
      %916 = vrot.lane.b32.xlu0 %v897, 95
      %v917 = vpop.permute.xlu0 %916
      %918 = vrot.lane.b32.xlu0 %v898, 95
      %v919 = vpop.permute.xlu0 %918
      %920 = vrot.lane.b32.xlu0 %v899, 95
      %v921 = vpop.permute.xlu0 %920
      %922 = vrot.lane.b32.xlu0 %v900, 95
      %v923 = vpop.permute.xlu0 %922
      %924 = vrot.lane.b32.xlu0 %v901, 95
      %v925 = vpop.permute.xlu0 %924
      %v926 = vsel %vm403, %v911, %v913
      %v927 = vsel %vm403, %v915, %v917
      %v928 = vsel %vm403, %v919, %v921
      %v929 = vsel %vm403, %v923, %v925
      %938 = vst [vmem:[#allocation4 + $0x1c0] sm:$0xff] %v926
      %939 = vst.msk [vmem:[#allocation4 + $0x1c8] sm:$0xff] %vm574, %v913
      %940 = vst [vmem:[#allocation4 + $0x1d0] sm:$0xff] %v927
      %941 = vst.msk [vmem:[#allocation4 + $0x1d8] sm:$0xff] %vm574, %v917
      %942 = vst [vmem:[#allocation4 + $0x1e0] sm:$0xff] %v928
      %943 = vst.msk [vmem:[#allocation4 + $0x1e8] sm:$0xff] %vm574, %v921
      %944 = vst [vmem:[#allocation4 + $0x1f0] sm:$0xff] %v929
      %945 = vst.msk [vmem:[#allocation4 + $0x1f8] sm:$0xff] %vm574, %v925
      %v946 = vld [vmem:[#allocation3] sm:$0xff]
      %v947 = vld [vmem:[#allocation3 + $0x8] sm:$0xff]
      %v948 = vld [vmem:[#allocation3 + $0x10] sm:$0xff]
      %v949 = vld [vmem:[#allocation3 + $0x18] sm:$0xff]
      %v950 = vld [vmem:[#allocation3 + $0x20] sm:$0xff]
      %v951 = vld [vmem:[#allocation3 + $0x28] sm:$0xff]
      %v952 = vld [vmem:[#allocation3 + $0x30] sm:$0xff]
      %v953 = vld [vmem:[#allocation3 + $0x38] sm:$0xff]
      %962 = vrot.lane.b32.xlu0 %v946, 94
      %v963 = vpop.permute.xlu0 %962
      %964 = vrot.lane.b32.xlu0 %v947, 94
      %v965 = vpop.permute.xlu0 %964
      %966 = vrot.lane.b32.xlu0 %v948, 94
      %v967 = vpop.permute.xlu0 %966
      %968 = vrot.lane.b32.xlu0 %v949, 94
      %v969 = vpop.permute.xlu0 %968
      %970 = vrot.lane.b32.xlu0 %v950, 94
      %v971 = vpop.permute.xlu0 %970
      %972 = vrot.lane.b32.xlu0 %v951, 94
      %v973 = vpop.permute.xlu0 %972
      %974 = vrot.lane.b32.xlu0 %v952, 94
      %v975 = vpop.permute.xlu0 %974
      %976 = vrot.lane.b32.xlu0 %v953, 94
      %v977 = vpop.permute.xlu0 %976
      %v978 = vsel %vm427, %v963, %v965
      %v979 = vsel %vm427, %v967, %v969
      %v980 = vsel %vm427, %v971, %v973
      %v981 = vsel %vm427, %v975, %v977
      %990 = vst [vmem:[#allocation4 + $0x200] sm:$0xff] %v978
      %991 = vst.msk [vmem:[#allocation4 + $0x208] sm:$0xff] %vm574, %v965
      %992 = vst [vmem:[#allocation4 + $0x210] sm:$0xff] %v979
      %993 = vst.msk [vmem:[#allocation4 + $0x218] sm:$0xff] %vm574, %v969
      %994 = vst [vmem:[#allocation4 + $0x220] sm:$0xff] %v980
      %995 = vst.msk [vmem:[#allocation4 + $0x228] sm:$0xff] %vm574, %v973
      %996 = vst [vmem:[#allocation4 + $0x230] sm:$0xff] %v981
      %997 = vst.msk [vmem:[#allocation4 + $0x238] sm:$0xff] %vm574, %v977
      %v998 = vld [vmem:[%s3] sm:$0xff]
      %v999 = vld [vmem:[%s3 + $0x8] sm:$0xff]
      %v1000 = vld [vmem:[%s3 + $0x10] sm:$0xff]
      %v1001 = vld [vmem:[%s3 + $0x18] sm:$0xff]
      %v1002 = vld [vmem:[%s3 + $0x20] sm:$0xff]
      %v1003 = vld [vmem:[%s3 + $0x28] sm:$0xff]
      %v1004 = vld [vmem:[%s3 + $0x30] sm:$0xff]
      %v1005 = vld [vmem:[%s3 + $0x38] sm:$0xff]
      %v1006 = vld [vmem:[%s3 + $0x40] sm:$0xff]
      %v1007 = vld [vmem:[%s3 + $0x48] sm:$0xff]
      %v1008 = vld [vmem:[%s3 + $0x50] sm:$0xff]
      %v1009 = vld [vmem:[%s3 + $0x58] sm:$0xff]
      %v1010 = vld [vmem:[#allocation4] sm:$0xff]
      %v1011 = vld [vmem:[#allocation4 + $0x8] sm:$0xff]
      %v1012 = vld [vmem:[#allocation4 + $0x10] sm:$0xff]
      %v1013 = vld [vmem:[#allocation4 + $0x18] sm:$0xff]
      %v1014 = vld [vmem:[#allocation4 + $0x20] sm:$0xff]
      %v1015 = vld [vmem:[#allocation4 + $0x28] sm:$0xff]
      %v1016 = vld [vmem:[#allocation4 + $0x30] sm:$0xff]
      %v1017 = vld [vmem:[#allocation4 + $0x38] sm:$0xff]
      %v1018 = vld [vmem:[#allocation4 + $0x40] sm:$0xff]
      %v1019 = vld [vmem:[#allocation4 + $0x48] sm:$0xff]
      %v1020 = vld [vmem:[#allocation4 + $0x50] sm:$0xff]
      %v1021 = vld [vmem:[#allocation4 + $0x58] sm:$0xff]
      %v1022 = vld [vmem:[#allocation4 + $0x60] sm:$0xff]
      %v1023 = vld [vmem:[#allocation4 + $0x68] sm:$0xff]
      %v1024 = vld [vmem:[#allocation4 + $0x70] sm:$0xff]
      %v1025 = vld [vmem:[#allocation4 + $0x78] sm:$0xff]
      %v1026 = vld [vmem:[#allocation4 + $0x80] sm:$0xff]
      %v1027 = vld [vmem:[#allocation4 + $0x88] sm:$0xff]
      %v1028 = vld [vmem:[#allocation4 + $0x90] sm:$0xff]
      %v1029 = vld [vmem:[#allocation4 + $0x98] sm:$0xff]
      %v1030 = vld [vmem:[#allocation4 + $0xa0] sm:$0xff]
      %v1031 = vld [vmem:[#allocation4 + $0xa8] sm:$0xff]
      %v1032 = vld [vmem:[#allocation4 + $0xb0] sm:$0xff]
      %v1033 = vld [vmem:[#allocation4 + $0xb8] sm:$0xff]
      %v1034 = vld [vmem:[#allocation4 + $0xc0] sm:$0xff]
      %v1035 = vld [vmem:[#allocation4 + $0xc8] sm:$0xff]
      %v1036 = vld [vmem:[#allocation4 + $0xd0] sm:$0xff]
      %v1037 = vld [vmem:[#allocation4 + $0xd8] sm:$0xff]
      %v1038 = vld [vmem:[#allocation4 + $0xe0] sm:$0xff]
      %v1039 = vld [vmem:[#allocation4 + $0xe8] sm:$0xff]
      %v1040 = vld [vmem:[#allocation4 + $0xf0] sm:$0xff]
      %v1041 = vld [vmem:[#allocation4 + $0xf8] sm:$0xff]
      %v1042 = vld [vmem:[#allocation4 + $0x100] sm:$0xff]
      %v1043 = vld [vmem:[#allocation4 + $0x108] sm:$0xff]
      %v1044 = vld [vmem:[#allocation4 + $0x110] sm:$0xff]
      %v1045 = vld [vmem:[#allocation4 + $0x118] sm:$0xff]
      %v1046 = vld [vmem:[#allocation4 + $0x120] sm:$0xff]
      %v1047 = vld [vmem:[#allocation4 + $0x128] sm:$0xff]
      %v1048 = vld [vmem:[#allocation4 + $0x130] sm:$0xff]
      %v1049 = vld [vmem:[#allocation4 + $0x138] sm:$0xff]
      %v1050 = vld [vmem:[#allocation4 + $0x140] sm:$0xff]
      %v1051 = vld [vmem:[#allocation4 + $0x148] sm:$0xff]
      %v1052 = vld [vmem:[#allocation4 + $0x150] sm:$0xff]
      %v1053 = vld [vmem:[#allocation4 + $0x158] sm:$0xff]
      %v1054 = vld [vmem:[#allocation4 + $0x160] sm:$0xff]
      %v1055 = vld [vmem:[#allocation4 + $0x168] sm:$0xff]
      %v1056 = vld [vmem:[#allocation4 + $0x170] sm:$0xff]
      %v1057 = vld [vmem:[#allocation4 + $0x178] sm:$0xff]
      %v1058 = vld [vmem:[#allocation4 + $0x180] sm:$0xff]
      %v1059 = vld [vmem:[#allocation4 + $0x188] sm:$0xff]
      %v1060 = vld [vmem:[#allocation4 + $0x190] sm:$0xff]
      %v1061 = vld [vmem:[#allocation4 + $0x198] sm:$0xff]
      %v1062 = vld [vmem:[#allocation4 + $0x1a0] sm:$0xff]
      %v1063 = vld [vmem:[#allocation4 + $0x1a8] sm:$0xff]
      %v1064 = vld [vmem:[#allocation4 + $0x1b0] sm:$0xff]
      %v1065 = vld [vmem:[#allocation4 + $0x1b8] sm:$0xff]
      %v1066 = vld [vmem:[#allocation4 + $0x1c0] sm:$0xff]
      %v1067 = vld [vmem:[#allocation4 + $0x1c8] sm:$0xff]
      %v1068 = vld [vmem:[#allocation4 + $0x1d0] sm:$0xff]
      %v1069 = vld [vmem:[#allocation4 + $0x1d8] sm:$0xff]
      %v1070 = vld [vmem:[#allocation4 + $0x1e0] sm:$0xff]
      %v1071 = vld [vmem:[#allocation4 + $0x1e8] sm:$0xff]
      %v1072 = vld [vmem:[#allocation4 + $0x1f0] sm:$0xff]
      %v1073 = vld [vmem:[#allocation4 + $0x1f8] sm:$0xff]
      %v1074 = vld [vmem:[#allocation4 + $0x200] sm:$0xff]
      %v1075 = vld [vmem:[#allocation4 + $0x208] sm:$0xff]
      %v1076 = vld [vmem:[#allocation4 + $0x210] sm:$0xff]
      %v1077 = vld [vmem:[#allocation4 + $0x218] sm:$0xff]
      %v1078 = vld [vmem:[#allocation4 + $0x220] sm:$0xff]
      %v1079 = vld [vmem:[#allocation4 + $0x228] sm:$0xff]
      %v1080 = vld [vmem:[#allocation4 + $0x230] sm:$0xff]
      %v1081 = vld [vmem:[#allocation4 + $0x238] sm:$0xff]
      %v1082 = vld [vmem:[%s4] sm:$0xff]
      %v1083 = vld [vmem:[%s4 + $0x8] sm:$0xff]
      %v1084 = vld [vmem:[%s4 + $0x10] sm:$0xff]
      %v1085 = vld [vmem:[%s4 + $0x18] sm:$0xff]
      %1087 = vset.pattern.permute.xlu0 0
      %1088 = vperm.xlu0 %1087, %v1082
      %v1089 = vpop.permute.xlu0 %1088
      %1092 = vset.pattern.permute.xlu0 0
      %1093 = vperm.xlu0 %1092, %v1083
      %v1094 = vpop.permute.xlu0 %1093
      %1097 = vset.pattern.permute.xlu0 0
      %1098 = vperm.xlu0 %1097, %v1084
      %v1099 = vpop.permute.xlu0 %1098
      %1102 = vset.pattern.permute.xlu0 0
      %1103 = vperm.xlu0 %1102, %v1085
      %v1104 = vpop.permute.xlu0 %1103
      %vm1106 = vcmask 261120
      %v1108 = vsel %vm1106, %v1000, 0
      %v1111 = vsel %vm1106, %v1003, 0
      %v1114 = vsel %vm1106, %v1006, 0
      %v1117 = vsel %vm1106, %v1009, 0
      %1119 = vmatpush.msra.mxu0 %v1040
      %1120 = vmatpush.msra.mxu0 %v1038
      %1121 = vmatpush.msra.mxu0 %v1036
      %1122 = vmatpush.msra.mxu0 %v1034
      %1123 = vmatpush.msra.mxu0 %v1032
      %1124 = vmatpush.msra.mxu0 %v1030
      %1125 = vmatpush.msra.mxu0 %v1028
      %1126 = vmatpush.msra.mxu0 %v1026
      %1127 = vmatpush.msra.mxu0 %v1024
      %1128 = vmatpush.msra.mxu0 %v1022
      %1129 = vmatpush.msra.mxu0 %v1020
      %1130 = vmatpush.msra.mxu0 %v1018
      %1131 = vmatpush.msra.mxu0 %v1016
      %1132 = vmatpush.msra.mxu0 %v1014
      %1133 = vmatpush.msra.mxu0 %v1012
      %1134 = vmatpush.msra.mxu0 %v1010
      %1135 = vmatmul.f32.gmra.mxu0 %v998
      %v1136 = vpop.f32.mrf.mxu0
      %v1137 = vadd.f32 %v1089, %v1136
      %1138 = vmatmul.f32.gmra.mxu0 %v1001
      %v1139 = vpop.f32.mrf.mxu0
      %v1140 = vadd.f32 %v1094, %v1139
      %1141 = vmatmul.f32.gmra.mxu0 %v1004
      %v1142 = vpop.f32.mrf.mxu0
      %v1143 = vadd.f32 %v1099, %v1142
      %1144 = vmatmul.f32.gmra.mxu0 %v1007
      %v1145 = vpop.f32.mrf.mxu0
      %v1146 = vadd.f32 %v1104, %v1145
      %1147 = vdwg.mxu0
      %1148 = vmatpush.msra.mxu0 %v1072
      %1149 = vmatpush.msra.mxu0 %v1070
      %1150 = vmatpush.msra.mxu0 %v1068
      %1151 = vmatpush.msra.mxu0 %v1066
      %1152 = vmatpush.msra.mxu0 %v1064
      %1153 = vmatpush.msra.mxu0 %v1062
      %1154 = vmatpush.msra.mxu0 %v1060
      %1155 = vmatpush.msra.mxu0 %v1058
      %1156 = vmatpush.msra.mxu0 %v1056
      %1157 = vmatpush.msra.mxu0 %v1054
      %1158 = vmatpush.msra.mxu0 %v1052
      %1159 = vmatpush.msra.mxu0 %v1050
      %1160 = vmatpush.msra.mxu0 %v1048
      %1161 = vmatpush.msra.mxu0 %v1046
      %1162 = vmatpush.msra.mxu0 %v1044
      %1163 = vmatpush.msra.mxu0 %v1042
      %1164 = vmatmul.f32.gmra.mxu0 %v999
      %v1165 = vpop.f32.mrf.mxu0
      %v1166 = vadd.f32 %v1137, %v1165
      %1167 = vmatmul.f32.gmra.mxu0 %v1002
      %v1168 = vpop.f32.mrf.mxu0
      %v1169 = vadd.f32 %v1140, %v1168
      %1170 = vmatmul.f32.gmra.mxu0 %v1005
      %v1171 = vpop.f32.mrf.mxu0
      %v1172 = vadd.f32 %v1143, %v1171
      %1173 = vmatmul.f32.gmra.mxu0 %v1008
      %v1174 = vpop.f32.mrf.mxu0
      %v1175 = vadd.f32 %v1146, %v1174
      %1176 = vdwg.mxu0
      %1177 = vmatpush.msra.mxu0 0.0
      %1178 = vmatpush.msra.mxu0 0.0
      %1179 = vmatpush.msra.mxu0 0.0
      %1180 = vmatpush.msra.mxu0 0.0
      %1181 = vmatpush.msra.mxu0 0.0
      %1182 = vmatpush.msra.mxu0 0.0
      %1183 = vmatpush.msra.mxu0 0.0
      %1184 = vmatpush.msra.mxu0 0.0
      %1185 = vmatpush.msra.mxu0 0.0
      %1186 = vmatpush.msra.mxu0 0.0
      %1187 = vmatpush.msra.mxu0 0.0
      %1188 = vmatpush.msra.mxu0 0.0
      %1189 = vmatpush.msra.mxu0 %v1080
      %1190 = vmatpush.msra.mxu0 %v1078
      %1191 = vmatpush.msra.mxu0 %v1076
      %1192 = vmatpush.msra.mxu0 %v1074
      %1193 = vmatmul.f32.gmra.mxu0 %v1108
      %v1194 = vpop.f32.mrf.mxu0
      %v1195 = vadd.f32 %v1166, %v1194
      %1196 = vmatmul.f32.gmra.mxu0 %v1111
      %v1197 = vpop.f32.mrf.mxu0
      %v1198 = vadd.f32 %v1169, %v1197
      %1199 = vmatmul.f32.gmra.mxu0 %v1114
      %v1200 = vpop.f32.mrf.mxu0
      %v1201 = vadd.f32 %v1172, %v1200
      %1202 = vmatmul.f32.gmra.mxu0 %v1117
      %v1203 = vpop.f32.mrf.mxu0
      %v1204 = vadd.f32 %v1175, %v1203
      %1205 = vdwg.mxu0
      %1206 = vmatpush.msra.mxu0 %v1041
      %1207 = vmatpush.msra.mxu0 %v1039
      %1208 = vmatpush.msra.mxu0 %v1037
      %1209 = vmatpush.msra.mxu0 %v1035
      %1210 = vmatpush.msra.mxu0 %v1033
      %1211 = vmatpush.msra.mxu0 %v1031
      %1212 = vmatpush.msra.mxu0 %v1029
      %1213 = vmatpush.msra.mxu0 %v1027
      %1214 = vmatpush.msra.mxu0 %v1025
      %1215 = vmatpush.msra.mxu0 %v1023
      %1216 = vmatpush.msra.mxu0 %v1021
      %1217 = vmatpush.msra.mxu0 %v1019
      %1218 = vmatpush.msra.mxu0 %v1017
      %1219 = vmatpush.msra.mxu0 %v1015
      %1220 = vmatpush.msra.mxu0 %v1013
      %1221 = vmatpush.msra.mxu0 %v1011
      %1222 = vmatmul.f32.gmra.mxu0 %v998
      %v1223 = vpop.f32.mrf.mxu0
      %v1224 = vadd.f32 %v1089, %v1223
      %1225 = vmatmul.f32.gmra.mxu0 %v1001
      %v1226 = vpop.f32.mrf.mxu0
      %v1227 = vadd.f32 %v1094, %v1226
      %1228 = vmatmul.f32.gmra.mxu0 %v1004
      %v1229 = vpop.f32.mrf.mxu0
      %v1230 = vadd.f32 %v1099, %v1229
      %1231 = vmatmul.f32.gmra.mxu0 %v1007
      %v1232 = vpop.f32.mrf.mxu0
      %v1233 = vadd.f32 %v1104, %v1232
      %1234 = vdwg.mxu0
      %1235 = vmatpush.msra.mxu0 %v1073
      %1236 = vmatpush.msra.mxu0 %v1071
      %1237 = vmatpush.msra.mxu0 %v1069
      %1238 = vmatpush.msra.mxu0 %v1067
      %1239 = vmatpush.msra.mxu0 %v1065
      %1240 = vmatpush.msra.mxu0 %v1063
      %1241 = vmatpush.msra.mxu0 %v1061
      %1242 = vmatpush.msra.mxu0 %v1059
      %1243 = vmatpush.msra.mxu0 %v1057
      %1244 = vmatpush.msra.mxu0 %v1055
      %1245 = vmatpush.msra.mxu0 %v1053
      %1246 = vmatpush.msra.mxu0 %v1051
      %1247 = vmatpush.msra.mxu0 %v1049
      %1248 = vmatpush.msra.mxu0 %v1047
      %1249 = vmatpush.msra.mxu0 %v1045
      %1250 = vmatpush.msra.mxu0 %v1043
      %1251 = vmatmul.f32.gmra.mxu0 %v999
      %v1252 = vpop.f32.mrf.mxu0
      %v1253 = vadd.f32 %v1224, %v1252
      %1254 = vmatmul.f32.gmra.mxu0 %v1002
      %v1255 = vpop.f32.mrf.mxu0
      %v1256 = vadd.f32 %v1227, %v1255
      %1257 = vmatmul.f32.gmra.mxu0 %v1005
      %v1258 = vpop.f32.mrf.mxu0
      %v1259 = vadd.f32 %v1230, %v1258
      %1260 = vmatmul.f32.gmra.mxu0 %v1008
      %v1261 = vpop.f32.mrf.mxu0
      %v1262 = vadd.f32 %v1233, %v1261
      %1263 = vdwg.mxu0
      %1264 = vmatpush.msra.mxu0 0.0
      %1265 = vmatpush.msra.mxu0 0.0
      %1266 = vmatpush.msra.mxu0 0.0
      %1267 = vmatpush.msra.mxu0 0.0
      %1268 = vmatpush.msra.mxu0 0.0
      %1269 = vmatpush.msra.mxu0 0.0
      %1270 = vmatpush.msra.mxu0 0.0
      %1271 = vmatpush.msra.mxu0 0.0
      %1272 = vmatpush.msra.mxu0 0.0
      %1273 = vmatpush.msra.mxu0 0.0
      %1274 = vmatpush.msra.mxu0 0.0
      %1275 = vmatpush.msra.mxu0 0.0
      %1276 = vmatpush.msra.mxu0 %v1081
      %1277 = vmatpush.msra.mxu0 %v1079
      %1278 = vmatpush.msra.mxu0 %v1077
      %1279 = vmatpush.msra.mxu0 %v1075
      %1280 = vmatmul.f32.gmra.mxu0 %v1108
      %v1281 = vpop.f32.mrf.mxu0
      %v1282 = vadd.f32 %v1253, %v1281
      %1283 = vmatmul.f32.gmra.mxu0 %v1111
      %v1284 = vpop.f32.mrf.mxu0
      %v1285 = vadd.f32 %v1256, %v1284
      %1286 = vmatmul.f32.gmra.mxu0 %v1114
      %v1287 = vpop.f32.mrf.mxu0
      %v1288 = vadd.f32 %v1259, %v1287
      %1289 = vmatmul.f32.gmra.mxu0 %v1117
      %v1290 = vpop.f32.mrf.mxu0
      %v1291 = vadd.f32 %v1262, %v1290
      %1292 = vdwg.mxu0
      %v1293 = vld [vmem:[%s5] sm:$0xff]
      %v1294 = vld [vmem:[%s5 + $0x8] sm:$0xff]
      %v1295 = vld [vmem:[%s5 + $0x10] sm:$0xff]
      %v1296 = vld [vmem:[%s5 + $0x18] sm:$0xff]
      %v1297 = vmul.f32 %v1195, %v1195
      %v1298 = vmul.f32 %v1282, %v1282
      %v1299 = vmul.f32 %v1198, %v1198
      %v1300 = vmul.f32 %v1285, %v1285
      %v1301 = vmul.f32 %v1201, %v1201
      %v1302 = vmul.f32 %v1288, %v1288
      %v1303 = vmul.f32 %v1204, %v1204
      %v1304 = vmul.f32 %v1291, %v1291
      %v1306 = vsel %vm1106, %v1293, 0
      %v1309 = vsel %vm1106, %v1294, 0
      %v1312 = vsel %vm1106, %v1295, 0
      %v1315 = vsel %vm1106, %v1296, 0
      %1317 = vmatpush.msra.mxu0 0.0
      %1318 = vmatpush.msra.mxu0 0.0
      %1319 = vmatpush.msra.mxu0 0.0
      %1320 = vmatpush.msra.mxu0 0.0
      %1321 = vmatpush.msra.mxu0 0.0
      %1322 = vmatpush.msra.mxu0 0.0
      %1323 = vmatpush.msra.mxu0 0.0
      %1324 = vmatpush.msra.mxu0 0.0
      %1325 = vmatpush.msra.mxu0 0.0
      %1326 = vmatpush.msra.mxu0 0.0
      %1327 = vmatpush.msra.mxu0 0.0
      %1328 = vmatpush.msra.mxu0 0.0
      %1329 = vmatpush.msra.mxu0 %v1303
      %1330 = vmatpush.msra.mxu0 %v1301
      %1331 = vmatpush.msra.mxu0 %v1299
      %1332 = vmatpush.msra.mxu0 %v1297
      %1333 = vmatmul.f32.gmra.mxu0 %v1306
      %v1334 = vpop.f32.mrf.mxu0
      %v1335 = vadd.f32 0.0, %v1334
      %1336 = vmatmul.f32.gmra.mxu0 %v1309
      %v1337 = vpop.f32.mrf.mxu0
      %v1338 = vadd.f32 0.0, %v1337
      %1339 = vmatmul.f32.gmra.mxu0 %v1312
      %v1340 = vpop.f32.mrf.mxu0
      %v1341 = vadd.f32 0.0, %v1340
      %1342 = vmatmul.f32.gmra.mxu0 %v1315
      %v1343 = vpop.f32.mrf.mxu0
      %v1344 = vadd.f32 0.0, %v1343
      %1345 = vdwg.mxu0
      %1346 = vmatpush.msra.mxu0 0.0
      %1347 = vmatpush.msra.mxu0 0.0
      %1348 = vmatpush.msra.mxu0 0.0
      %1349 = vmatpush.msra.mxu0 0.0
      %1350 = vmatpush.msra.mxu0 0.0
      %1351 = vmatpush.msra.mxu0 0.0
      %1352 = vmatpush.msra.mxu0 0.0
      %1353 = vmatpush.msra.mxu0 0.0
      %1354 = vmatpush.msra.mxu0 0.0
      %1355 = vmatpush.msra.mxu0 0.0
      %1356 = vmatpush.msra.mxu0 0.0
      %1357 = vmatpush.msra.mxu0 0.0
      %1358 = vmatpush.msra.mxu0 %v1304
      %1359 = vmatpush.msra.mxu0 %v1302
      %1360 = vmatpush.msra.mxu0 %v1300
      %1361 = vmatpush.msra.mxu0 %v1298
      %1362 = vmatmul.f32.gmra.mxu0 %v1306
      %v1363 = vpop.f32.mrf.mxu0
      %v1364 = vadd.f32 0.0, %v1363
      %1365 = vmatmul.f32.gmra.mxu0 %v1309
      %v1366 = vpop.f32.mrf.mxu0
      %v1367 = vadd.f32 0.0, %v1366
      %1368 = vmatmul.f32.gmra.mxu0 %v1312
      %v1369 = vpop.f32.mrf.mxu0
      %v1370 = vadd.f32 0.0, %v1369
      %1371 = vmatmul.f32.gmra.mxu0 %v1315
      %v1372 = vpop.f32.mrf.mxu0
      %v1373 = vadd.f32 0.0, %v1372
      %1374 = vdwg.mxu0
      %v1375 = vmul.f32 %v1335, 2e-05
      %v1376 = vmul.f32 %v1364, 2e-05
      %v1377 = vmul.f32 %v1338, 2e-05
      %v1378 = vmul.f32 %v1367, 2e-05
      %v1379 = vmul.f32 %v1341, 2e-05
      %v1380 = vmul.f32 %v1370, 2e-05
      %v1381 = vmul.f32 %v1344, 2e-05
      %v1382 = vmul.f32 %v1373, 2e-05
      %v1383 = vadd.f32 %v1375, 1.0
      %v1384 = vadd.f32 %v1376, 1.0
      %v1385 = vadd.f32 %v1377, 1.0
      %v1386 = vadd.f32 %v1378, 1.0
      %v1387 = vadd.f32 %v1379, 1.0
      %v1388 = vadd.f32 %v1380, 1.0
      %v1389 = vadd.f32 %v1381, 1.0
      %v1390 = vadd.f32 %v1382, 1.0
      %v1391 = vrsqrt.pop %v1383
      %v1392 = vmul.f32 %v1391, %v1383
      %v1393 = vmul.f32 %v1392, %v1391
      %v1394 = vmul.f32 0.5, %v1393
      %v1395 = vsub.f32 1.5, %v1394
      %v1396 = vmul.f32 %v1391, %v1395
      %vm1397 = vweird.f32 %v1383
      %vm1398 = vweird.f32 %v1391
      %vm1399 = vmor %vm1397, %vm1398
      %v1400 = vsel %vm1399, %v1391, %v1396
      %v1401 = vrsqrt.pop %v1384
      %v1402 = vmul.f32 %v1401, %v1384
      %v1403 = vmul.f32 %v1402, %v1401
      %v1404 = vmul.f32 0.5, %v1403
      %v1405 = vsub.f32 1.5, %v1404
      %v1406 = vmul.f32 %v1401, %v1405
      %vm1407 = vweird.f32 %v1384
      %vm1408 = vweird.f32 %v1401
      %vm1409 = vmor %vm1407, %vm1408
      %v1410 = vsel %vm1409, %v1401, %v1406
      %v1411 = vrsqrt.pop %v1385
      %v1412 = vmul.f32 %v1411, %v1385
      %v1413 = vmul.f32 %v1412, %v1411
      %v1414 = vmul.f32 0.5, %v1413
      %v1415 = vsub.f32 1.5, %v1414
      %v1416 = vmul.f32 %v1411, %v1415
      %vm1417 = vweird.f32 %v1385
      %vm1418 = vweird.f32 %v1411
      %vm1419 = vmor %vm1417, %vm1418
      %v1420 = vsel %vm1419, %v1411, %v1416
      %v1421 = vrsqrt.pop %v1386
      %v1422 = vmul.f32 %v1421, %v1386
      %v1423 = vmul.f32 %v1422, %v1421
      %v1424 = vmul.f32 0.5, %v1423
      %v1425 = vsub.f32 1.5, %v1424
      %v1426 = vmul.f32 %v1421, %v1425
      %vm1427 = vweird.f32 %v1386
      %vm1428 = vweird.f32 %v1421
      %vm1429 = vmor %vm1427, %vm1428
      %v1430 = vsel %vm1429, %v1421, %v1426
      %v1431 = vrsqrt.pop %v1387
      %v1432 = vmul.f32 %v1431, %v1387
      %v1433 = vmul.f32 %v1432, %v1431
      %v1434 = vmul.f32 0.5, %v1433
      %v1435 = vsub.f32 1.5, %v1434
      %v1436 = vmul.f32 %v1431, %v1435
      %vm1437 = vweird.f32 %v1387
      %vm1438 = vweird.f32 %v1431
      %vm1439 = vmor %vm1437, %vm1438
      %v1440 = vsel %vm1439, %v1431, %v1436
      %v1441 = vrsqrt.pop %v1388
      %v1442 = vmul.f32 %v1441, %v1388
      %v1443 = vmul.f32 %v1442, %v1441
      %v1444 = vmul.f32 0.5, %v1443
      %v1445 = vsub.f32 1.5, %v1444
      %v1446 = vmul.f32 %v1441, %v1445
      %vm1447 = vweird.f32 %v1388
      %vm1448 = vweird.f32 %v1441
      %vm1449 = vmor %vm1447, %vm1448
      %v1450 = vsel %vm1449, %v1441, %v1446
      %v1451 = vrsqrt.pop %v1389
      %v1452 = vmul.f32 %v1451, %v1389
      %v1453 = vmul.f32 %v1452, %v1451
      %v1454 = vmul.f32 0.5, %v1453
      %v1455 = vsub.f32 1.5, %v1454
      %v1456 = vmul.f32 %v1451, %v1455
      %vm1457 = vweird.f32 %v1389
      %vm1458 = vweird.f32 %v1451
      %vm1459 = vmor %vm1457, %vm1458
      %v1460 = vsel %vm1459, %v1451, %v1456
      %v1461 = vrsqrt.pop %v1390
      %v1462 = vmul.f32 %v1461, %v1390
      %v1463 = vmul.f32 %v1462, %v1461
      %v1464 = vmul.f32 0.5, %v1463
      %v1465 = vsub.f32 1.5, %v1464
      %v1466 = vmul.f32 %v1461, %v1465
      %vm1467 = vweird.f32 %v1390
      %vm1468 = vweird.f32 %v1461
      %vm1469 = vmor %vm1467, %vm1468
      %v1470 = vsel %vm1469, %v1461, %v1466
      %v1471 = vrsqrt.pop %v1400
      %v1472 = vmul.f32 %v1471, %v1400
      %v1473 = vmul.f32 %v1472, %v1471
      %v1474 = vmul.f32 0.5, %v1473
      %v1475 = vsub.f32 1.5, %v1474
      %v1476 = vmul.f32 %v1471, %v1475
      %v1477 = vmul.f32 %v1400, %v1476
      %vm1478 = vcmp.eq.f32.partialorder %v1400, inf
      %v1479 = vsel %vm1478, %v1400, %v1477
      %vm1480 = vcmp.eq.f32.partialorder %v1400, 0.0
      %v1481 = vand.u32 %v1400, 2147483648
      %v1482 = vsel %vm1480, %v1481, %v1479
      %v1483 = vrsqrt.pop %v1410
      %v1484 = vmul.f32 %v1483, %v1410
      %v1485 = vmul.f32 %v1484, %v1483
      %v1486 = vmul.f32 0.5, %v1485
      %v1487 = vsub.f32 1.5, %v1486
      %v1488 = vmul.f32 %v1483, %v1487
      %v1489 = vmul.f32 %v1410, %v1488
      %vm1490 = vcmp.eq.f32.partialorder %v1410, inf
      %v1491 = vsel %vm1490, %v1410, %v1489
      %vm1492 = vcmp.eq.f32.partialorder %v1410, 0.0
      %v1493 = vand.u32 %v1410, 2147483648
      %v1494 = vsel %vm1492, %v1493, %v1491
      %v1495 = vrsqrt.pop %v1420
      %v1496 = vmul.f32 %v1495, %v1420
      %v1497 = vmul.f32 %v1496, %v1495
      %v1498 = vmul.f32 0.5, %v1497
      %v1499 = vsub.f32 1.5, %v1498
      %v1500 = vmul.f32 %v1495, %v1499
      %v1501 = vmul.f32 %v1420, %v1500
      %vm1502 = vcmp.eq.f32.partialorder %v1420, inf
      %v1503 = vsel %vm1502, %v1420, %v1501
      %vm1504 = vcmp.eq.f32.partialorder %v1420, 0.0
      %v1505 = vand.u32 %v1420, 2147483648
      %v1506 = vsel %vm1504, %v1505, %v1503
      %v1507 = vrsqrt.pop %v1430
      %v1508 = vmul.f32 %v1507, %v1430
      %v1509 = vmul.f32 %v1508, %v1507
      %v1510 = vmul.f32 0.5, %v1509
      %v1511 = vsub.f32 1.5, %v1510
      %v1512 = vmul.f32 %v1507, %v1511
      %v1513 = vmul.f32 %v1430, %v1512
      %vm1514 = vcmp.eq.f32.partialorder %v1430, inf
      %v1515 = vsel %vm1514, %v1430, %v1513
      %vm1516 = vcmp.eq.f32.partialorder %v1430, 0.0
      %v1517 = vand.u32 %v1430, 2147483648
      %v1518 = vsel %vm1516, %v1517, %v1515
      %v1519 = vrsqrt.pop %v1440
      %v1520 = vmul.f32 %v1519, %v1440
      %v1521 = vmul.f32 %v1520, %v1519
      %v1522 = vmul.f32 0.5, %v1521
      %v1523 = vsub.f32 1.5, %v1522
      %v1524 = vmul.f32 %v1519, %v1523
      %v1525 = vmul.f32 %v1440, %v1524
      %vm1526 = vcmp.eq.f32.partialorder %v1440, inf
      %v1527 = vsel %vm1526, %v1440, %v1525
      %vm1528 = vcmp.eq.f32.partialorder %v1440, 0.0
      %v1529 = vand.u32 %v1440, 2147483648
      %v1530 = vsel %vm1528, %v1529, %v1527
      %v1531 = vrsqrt.pop %v1450
      %v1532 = vmul.f32 %v1531, %v1450
      %v1533 = vmul.f32 %v1532, %v1531
      %v1534 = vmul.f32 0.5, %v1533
      %v1535 = vsub.f32 1.5, %v1534
      %v1536 = vmul.f32 %v1531, %v1535
      %v1537 = vmul.f32 %v1450, %v1536
      %vm1538 = vcmp.eq.f32.partialorder %v1450, inf
      %v1539 = vsel %vm1538, %v1450, %v1537
      %vm1540 = vcmp.eq.f32.partialorder %v1450, 0.0
      %v1541 = vand.u32 %v1450, 2147483648
      %v1542 = vsel %vm1540, %v1541, %v1539
      %v1543 = vrsqrt.pop %v1460
      %v1544 = vmul.f32 %v1543, %v1460
      %v1545 = vmul.f32 %v1544, %v1543
      %v1546 = vmul.f32 0.5, %v1545
      %v1547 = vsub.f32 1.5, %v1546
      %v1548 = vmul.f32 %v1543, %v1547
      %v1549 = vmul.f32 %v1460, %v1548
      %vm1550 = vcmp.eq.f32.partialorder %v1460, inf
      %v1551 = vsel %vm1550, %v1460, %v1549
      %vm1552 = vcmp.eq.f32.partialorder %v1460, 0.0
      %v1553 = vand.u32 %v1460, 2147483648
      %v1554 = vsel %vm1552, %v1553, %v1551
      %v1555 = vrsqrt.pop %v1470
      %v1556 = vmul.f32 %v1555, %v1470
      %v1557 = vmul.f32 %v1556, %v1555
      %v1558 = vmul.f32 0.5, %v1557
      %v1559 = vsub.f32 1.5, %v1558
      %v1560 = vmul.f32 %v1555, %v1559
      %v1561 = vmul.f32 %v1470, %v1560
      %vm1562 = vcmp.eq.f32.partialorder %v1470, inf
      %v1563 = vsel %vm1562, %v1470, %v1561
      %vm1564 = vcmp.eq.f32.partialorder %v1470, 0.0
      %v1565 = vand.u32 %v1470, 2147483648
      %v1566 = vsel %vm1564, %v1565, %v1563
      %v1567 = vmul.f32 %v1400, %v1482
      %v1568 = vmul.f32 %v1410, %v1494
      %v1569 = vmul.f32 %v1420, %v1506
      %v1570 = vmul.f32 %v1430, %v1518
      %v1571 = vmul.f32 %v1440, %v1530
      %v1572 = vmul.f32 %v1450, %v1542
      %v1573 = vmul.f32 %v1460, %v1554
      %v1574 = vmul.f32 %v1470, %v1566
      %v1575 = vmul.f32 %v1195, %v1567
      %v1576 = vmul.f32 %v1282, %v1568
      %v1577 = vmul.f32 %v1198, %v1569
      %v1578 = vmul.f32 %v1285, %v1570
      %v1579 = vmul.f32 %v1201, %v1571
      %v1580 = vmul.f32 %v1288, %v1572
      %v1581 = vmul.f32 %v1204, %v1573
      %v1582 = vmul.f32 %v1291, %v1574
      %1583 = vst [vmem:[%s251] sm:$0xff] %v1575
      %1584 = vst.msk [vmem:[%s251 + $0x8] sm:$0xff] %vm574, %v1576
      %1585 = vst [vmem:[%s251 + $0x10] sm:$0xff] %v1577
      %1586 = vst.msk [vmem:[%s251 + $0x18] sm:$0xff] %vm574, %v1578
      %1587 = vst [vmem:[%s251 + $0x20] sm:$0xff] %v1579
      %1588 = vst.msk [vmem:[%s251 + $0x28] sm:$0xff] %vm574, %v1580
      %1589 = vst [vmem:[%s251 + $0x30] sm:$0xff] %v1581
      %1590 = vst.msk [vmem:[%s251 + $0x38] sm:$0xff] %vm574, %v1582
      %p1591 = scmp.lt.s32.totalorder %s17, 3
      %s1592 = scalar_select %p1591, %s17, 3
      %s1593 = smul.addr %s1592, 8
      %s1594 = smul.addr %s1593, 8
      %s1595 = scalar_lea.vmem %s6, %s1594
      // Predicated region
      $region45: #{dcfnet_forward.2} parent=43 // pred_check
        %p1596 = pneg %p166
      $region46: #{dcfnet_forward.2} parent=43 // pred_check_branch
        %1598 = sbr.rel (%p1596) target = $region48
      $region47: #{dcfnet_forward.2} parent=43 // pred_region
        _
      $region48: #{dcfnet_forward.2} parent=43 // pred_fallthru
        _
    $region44: #{dcfnet_forward.2} parent=5 // pred_fallthru
      _
    %p1599 = scmp.le.s32.totalorder 2, %s12
    // Predicated region
    $region49: #{dcfnet_forward.2} parent=5 // pred_check
      %p1600 = pneg %p1599
    $region50: #{dcfnet_forward.2} parent=5 // pred_check_branch
      %1602 = sbr.rel (%p1600) target = $region52
    $region51: #{dcfnet_forward.2} parent=5 // pred_region
      %s1603 = ssub.s32 %s12, 2
      // Predicated region
      $region53: #{dcfnet_forward.2} parent=51 // pred_check
        %p1604 = pneg %p172
      $region54: #{dcfnet_forward.2} parent=51 // pred_check_branch
        %1606 = sbr.rel (%p1604) target = $region56
      $region55: #{dcfnet_forward.2} parent=51 // pred_region
        %p1607 = scmp.lt.s32.totalorder %s18, 3
        %s1608 = scalar_select %p1607, %s18, 3
        %s1609 = smul.addr %s1608, 8
        %s1610 = smul.addr %s1609, 8
        %s1611 = scalar_lea.vmem %s6, %s1610
      $region56: #{dcfnet_forward.2} parent=51 // pred_fallthru
        _
    $region52: #{dcfnet_forward.2} parent=5 // pred_fallthru
      _
  $region6: #{dcfnet_forward.2} parent=0 // loop_footer
    %s16 = sadd.s32 1, %s12
  $region7: #{dcfnet_forward.2} parent=0 // loop_footer_branch
    %11 = sbr.rel target = $region3
  $region8: #{dcfnet_forward.2} parent=0 // loop_exit
    _

// kernel: custom-call
$region0: #{custom-call}
  %s0 = inlined_call_operand.hbm [shape: c64[1,1,12,7], index: 0, kind: input, shape index: {}]
  %s1 = inlined_call_operand.vmem [shape: f32[1,1,12,7], index: 1, kind: output, shape index: {}]
  $region1: #{custom-call} parent=0
    #allocation0 [shape = 's32[1]{0}', space=sflag, size = 0x4, scoped, tag = 'scoped memory for custom-call']
    %2 = vsyncpa [#allocation0], 0
    %s4 = sshll.u32 %s0, 4
    %s5 = int_to_ptr.hbm [resolvable:$true] %s4
    %s6 = sshll.u32 %s1, 4
    %s7 = int_to_ptr.vmem [resolvable:$true] %s6
    %9 = dma.hbm_to_vmem [thread:$0]  %s5, 112, %s7, [#allocation0]
    %11 = dma.done [#allocation0], 112
    %12 = vsyncpa [#allocation0], 1

// kernel: custom-call.1
$region0: #{custom-call.1}
  %s0 = inlined_call_operand.hbm [shape: c64[1,1,12,7], index: 0, kind: input, shape index: {}]
  %s1 = inlined_call_operand.vmem [shape: f32[1,1,12,7], index: 1, kind: output, shape index: {}]
  %s2 = scalar_lea.hbm %s0, 7
  $region1: #{custom-call.1} parent=0
    #allocation0 [shape = 's32[1]{0}', space=sflag, size = 0x4, scoped, tag = 'scoped memory for custom-call.1']
    %3 = vsyncpa [#allocation0], 0
    %s5 = sshll.u32 %s2, 4
    %s6 = int_to_ptr.hbm [resolvable:$true] %s5
    %s7 = sshll.u32 %s1, 4
    %s8 = int_to_ptr.vmem [resolvable:$true] %s7
    %10 = dma.hbm_to_vmem [thread:$0]  %s6, 112, %s8, [#allocation0]
    %12 = dma.done [#allocation0], 112
    %13 = vsyncpa [#allocation0], 1

// kernel: dcfnet_forward.3
$region0: #{dcfnet_forward.3}
  #allocation0 [shape = 'u32[]', space=smem, size = 0x4, offset = 0x4, fixed_abs, tag = 'smem constant byte address 0x4 - core index']
  #allocation1 [shape = 'u32[72,128]{1,0:T(1,128)}', space=vmem, size = 0x9000, scoped, tag = 'internal scratch']
  %s0 = inlined_call_operand.vmem [shape: f32[2,32,128], index: 0, kind: input, shape index: {}]
  %s1 = inlined_call_operand.vmem [shape: f32[2,32,128], index: 1, kind: input, shape index: {}]
  %s2 = inlined_call_operand.vmem [shape: f32[2,32,128], index: 2, kind: input, shape index: {}]
  %s3 = inlined_call_operand.vmem [shape: f32[2,32,128], index: 3, kind: input, shape index: {}]
  %s4 = inlined_call_operand.vmem [shape: f32[1,1,128], index: 4, kind: input, shape index: {}]
  %s5 = inlined_call_operand.vmem [shape: f32[1,1,128], index: 5, kind: input, shape index: {}]
  %s6 = inlined_call_operand.vmem [shape: f32[2,1,128], index: 6, kind: output, shape index: {0}]
  %s7 = inlined_call_operand.vmem [shape: f32[2,1,128], index: 7, kind: output, shape index: {1}]
  %8 = xla_tuple %s6, %s7
  %s9 = sld [smem:[#allocation0]]
  $region65: #{dcfnet_forward.3} parent=0
    _
  %s11 = ssub.s32 1, %s9
  %s12 = scalar_select 0, %s11, %s9
  loop: start=0, step=1, limit=4
  $region2: #{dcfnet_forward.3} parent=0 // loop_pre_header
    _
  $region3: #{dcfnet_forward.3} parent=0 // loop_header
    %s14 = sphi 0, %s18
    %p15 = scmp.ge.s32.totalorder %s14, 4
    %s21 = sphi 0, %s33
    %s22 = sphi 0, %s29
    %s23 = sphi 0, %s21
    %s24 = sphi 0, %s22
    %s25 = sphi 0, %s23
    %s26 = sphi 0, %s24
    %s38 = sphi 0, %s40
    %s41 = sphi 0, %s38
    %s42 = sphi 0, %s41
    %s58 = sphi 0, %s42
    %s66 = sphi 0, %s68
    %s69 = sphi 0, %s66
    %s70 = sphi 0, %s69
    %s86 = sphi 0, %s70
    %s94 = sphi 0, %s96
    %s97 = sphi 0, %s94
    %s98 = sphi 0, %s97
    %s114 = sphi 0, %s98
    %s122 = sphi 0, %s124
    %s125 = sphi 0, %s122
    %s126 = sphi 0, %s125
    %s142 = sphi 0, %s126
    %s148 = sphi 0, %s150
    %s151 = sphi 0, %s148
    %s152 = sphi 0, %s151
    %s168 = sphi 0, %s152
    %s174 = sphi 0, %s176
    %s177 = sphi 0, %s174
    %s178 = sphi 0, %s177
    %s194 = sphi 0, %s178
    %s202 = sphi 0, %s204
    %s205 = sphi 0, %s202
    %s206 = sphi 0, %s205
    %s222 = sphi 0, %s206
    %s230 = sphi 0, %s232
    %s233 = sphi 0, %s230
    %s234 = sphi 0, %s233
    %s250 = sphi 0, %s234
  $region4: #{dcfnet_forward.3} parent=0 // loop_header_branch
    %17 = sbr.rel (%p15) target = $region8
  $region5: #{dcfnet_forward.3} parent=0 // loop_body
    %s19 = ssub.s32 %s14, 1
    %s20 = ssub.s32 %s14, 2
    %s27 = sadd.s32 1, %s22
    %p28 = scmp.ge.s32.totalorder %s27, 1
    %s29 = scalar_select %p28, 0, %s27
    %s30 = sadd.s32 1, %s21
    %s31 = scalar_select %p28, %s30, %s21
    %p32 = scmp.ge.s32.totalorder %s31, 2
    %s33 = scalar_select %p32, 0, %s31
    %s34 = ssub.s32 %s21, %s33
    %s35 = ssub.s32 %s22, %s29
    %s36 = sor.u32 %s34, %s35
    %p37 = scmp.eq.s32.totalorder %s36, 0
    %s39 = sadd.s32 %s38, 1
    %s40 = scalar_select %p37, %s38, %s39
    %p43 = pneg %p37
    %p44 = scmp.eq.s32.totalorder %s14, 1
    %p45 = por %p43, %p44
    %p46 = scmp.ne.s32.totalorder %s38, %s41
    %p47 = scmp.eq.s32.totalorder %s14, 0
    %p48 = por %p46, %p47
    %p49 = scmp.ne.s32.totalorder %s38, %s41
    %p50 = scmp.eq.s32.totalorder %s19, 1
    %p51 = por %p49, %p50
    %p52 = scmp.ne.s32.totalorder %s41, %s42
    %p53 = scmp.eq.s32.totalorder %s19, 0
    %p54 = por %p52, %p53
    %p55 = scmp.ne.s32.totalorder %s41, %s42
    %p56 = scmp.eq.s32.totalorder %s20, 1
    %p57 = por %p55, %p56
    %p59 = scmp.ne.s32.totalorder %s42, %s58
    %p60 = scmp.eq.s32.totalorder %s20, 0
    %p61 = por %p59, %p60
    %s62 = ssub.s32 %s21, %s33
    %s63 = ssub.s32 %s22, %s29
    %s64 = sor.u32 %s62, %s63
    %p65 = scmp.eq.s32.totalorder %s64, 0
    %s67 = sadd.s32 %s66, 1
    %s68 = scalar_select %p65, %s66, %s67
    %p71 = pneg %p65
    %p72 = scmp.eq.s32.totalorder %s14, 1
    %p73 = por %p71, %p72
    %p74 = scmp.ne.s32.totalorder %s66, %s69
    %p75 = scmp.eq.s32.totalorder %s14, 0
    %p76 = por %p74, %p75
    %p77 = scmp.ne.s32.totalorder %s66, %s69
    %p78 = scmp.eq.s32.totalorder %s19, 1
    %p79 = por %p77, %p78
    %p80 = scmp.ne.s32.totalorder %s69, %s70
    %p81 = scmp.eq.s32.totalorder %s19, 0
    %p82 = por %p80, %p81
    %p83 = scmp.ne.s32.totalorder %s69, %s70
    %p84 = scmp.eq.s32.totalorder %s20, 1
    %p85 = por %p83, %p84
    %p87 = scmp.ne.s32.totalorder %s70, %s86
    %p88 = scmp.eq.s32.totalorder %s20, 0
    %p89 = por %p87, %p88
    %s90 = ssub.s32 %s21, %s33
    %s91 = ssub.s32 %s22, %s29
    %s92 = sor.u32 %s90, %s91
    %p93 = scmp.eq.s32.totalorder %s92, 0
    %s95 = sadd.s32 %s94, 1
    %s96 = scalar_select %p93, %s94, %s95
    %p99 = pneg %p93
    %p100 = scmp.eq.s32.totalorder %s14, 1
    %p101 = por %p99, %p100
    %p102 = scmp.ne.s32.totalorder %s94, %s97
    %p103 = scmp.eq.s32.totalorder %s14, 0
    %p104 = por %p102, %p103
    %p105 = scmp.ne.s32.totalorder %s94, %s97
    %p106 = scmp.eq.s32.totalorder %s19, 1
    %p107 = por %p105, %p106
    %p108 = scmp.ne.s32.totalorder %s97, %s98
    %p109 = scmp.eq.s32.totalorder %s19, 0
    %p110 = por %p108, %p109
    %p111 = scmp.ne.s32.totalorder %s97, %s98
    %p112 = scmp.eq.s32.totalorder %s20, 1
    %p113 = por %p111, %p112
    %p115 = scmp.ne.s32.totalorder %s98, %s114
    %p116 = scmp.eq.s32.totalorder %s20, 0
    %p117 = por %p115, %p116
    %s118 = ssub.s32 %s21, %s33
    %s119 = ssub.s32 %s22, %s29
    %s120 = sor.u32 %s118, %s119
    %p121 = scmp.eq.s32.totalorder %s120, 0
    %s123 = sadd.s32 %s122, 1
    %s124 = scalar_select %p121, %s122, %s123
    %p127 = pneg %p121
    %p128 = scmp.eq.s32.totalorder %s14, 1
    %p129 = por %p127, %p128
    %p130 = scmp.ne.s32.totalorder %s122, %s125
    %p131 = scmp.eq.s32.totalorder %s14, 0
    %p132 = por %p130, %p131
    %p133 = scmp.ne.s32.totalorder %s122, %s125
    %p134 = scmp.eq.s32.totalorder %s19, 1
    %p135 = por %p133, %p134
    %p136 = scmp.ne.s32.totalorder %s125, %s126
    %p137 = scmp.eq.s32.totalorder %s19, 0
    %p138 = por %p136, %p137
    %p139 = scmp.ne.s32.totalorder %s125, %s126
    %p140 = scmp.eq.s32.totalorder %s20, 1
    %p141 = por %p139, %p140
    %p143 = scmp.ne.s32.totalorder %s126, %s142
    %p144 = scmp.eq.s32.totalorder %s20, 0
    %p145 = por %p143, %p144
    %s146 = ssub.s32 %s22, %s29
    %p147 = scmp.eq.s32.totalorder %s146, 0
    %s149 = sadd.s32 %s148, 1
    %s150 = scalar_select %p147, %s148, %s149
    %p153 = pneg %p147
    %p154 = scmp.eq.s32.totalorder %s14, 1
    %p155 = por %p153, %p154
    %p156 = scmp.ne.s32.totalorder %s148, %s151
    %p157 = scmp.eq.s32.totalorder %s14, 0
    %p158 = por %p156, %p157
    %p159 = scmp.ne.s32.totalorder %s148, %s151
    %p160 = scmp.eq.s32.totalorder %s19, 1
    %p161 = por %p159, %p160
    %p162 = scmp.ne.s32.totalorder %s151, %s152
    %p163 = scmp.eq.s32.totalorder %s19, 0
    %p164 = por %p162, %p163
    %p165 = scmp.ne.s32.totalorder %s151, %s152
    %p166 = scmp.eq.s32.totalorder %s20, 1
    %p167 = por %p165, %p166
    %p169 = scmp.ne.s32.totalorder %s152, %s168
    %p170 = scmp.eq.s32.totalorder %s20, 0
    %p171 = por %p169, %p170
    %s172 = ssub.s32 %s22, %s29
    %p173 = scmp.eq.s32.totalorder %s172, 0
    %s175 = sadd.s32 %s174, 1
    %s176 = scalar_select %p173, %s174, %s175
    %p179 = pneg %p173
    %p180 = scmp.eq.s32.totalorder %s14, 1
    %p181 = por %p179, %p180
    %p182 = scmp.ne.s32.totalorder %s174, %s177
    %p183 = scmp.eq.s32.totalorder %s14, 0
    %p184 = por %p182, %p183
    %p185 = scmp.ne.s32.totalorder %s174, %s177
    %p186 = scmp.eq.s32.totalorder %s19, 1
    %p187 = por %p185, %p186
    %p188 = scmp.ne.s32.totalorder %s177, %s178
    %p189 = scmp.eq.s32.totalorder %s19, 0
    %p190 = por %p188, %p189
    %p191 = scmp.ne.s32.totalorder %s177, %s178
    %p192 = scmp.eq.s32.totalorder %s20, 1
    %p193 = por %p191, %p192
    %p195 = scmp.ne.s32.totalorder %s178, %s194
    %p196 = scmp.eq.s32.totalorder %s20, 0
    %p197 = por %p195, %p196
    %s198 = ssub.s32 %s21, %s33
    %s199 = ssub.s32 %s22, %s29
    %s200 = sor.u32 %s198, %s199
    %p201 = scmp.eq.s32.totalorder %s200, 0
    %s203 = sadd.s32 %s202, 1
    %s204 = scalar_select %p201, %s202, %s203
    %p207 = pneg %p201
    %p208 = scmp.eq.s32.totalorder %s14, 1
    %p209 = por %p207, %p208
    %p210 = scmp.ne.s32.totalorder %s202, %s205
    %p211 = scmp.eq.s32.totalorder %s14, 0
    %p212 = por %p210, %p211
    %p213 = scmp.ne.s32.totalorder %s202, %s205
    %p214 = scmp.eq.s32.totalorder %s19, 1
    %p215 = por %p213, %p214
    %p216 = scmp.ne.s32.totalorder %s205, %s206
    %p217 = scmp.eq.s32.totalorder %s19, 0
    %p218 = por %p216, %p217
    %p219 = scmp.ne.s32.totalorder %s205, %s206
    %p220 = scmp.eq.s32.totalorder %s20, 1
    %p221 = por %p219, %p220
    %p223 = scmp.ne.s32.totalorder %s206, %s222
    %p224 = scmp.eq.s32.totalorder %s20, 0
    %p225 = por %p223, %p224
    %s226 = ssub.s32 %s21, %s33
    %s227 = ssub.s32 %s22, %s29
    %s228 = sor.u32 %s226, %s227
    %p229 = scmp.eq.s32.totalorder %s228, 0
    %s231 = sadd.s32 %s230, 1
    %s232 = scalar_select %p229, %s230, %s231
    %p235 = pneg %p229
    %p236 = scmp.eq.s32.totalorder %s14, 1
    %p237 = por %p235, %p236
    %p238 = scmp.ne.s32.totalorder %s230, %s233
    %p239 = scmp.eq.s32.totalorder %s14, 0
    %p240 = por %p238, %p239
    %p241 = scmp.ne.s32.totalorder %s230, %s233
    %p242 = scmp.eq.s32.totalorder %s19, 1
    %p243 = por %p241, %p242
    %p244 = scmp.ne.s32.totalorder %s233, %s234
    %p245 = scmp.eq.s32.totalorder %s19, 0
    %p246 = por %p244, %p245
    %p247 = scmp.ne.s32.totalorder %s233, %s234
    %p248 = scmp.eq.s32.totalorder %s20, 1
    %p249 = por %p247, %p248
    %p251 = scmp.ne.s32.totalorder %s234, %s250
    %p252 = scmp.eq.s32.totalorder %s20, 0
    %p253 = por %p251, %p252
    %p254 = scmp.le.s32.totalorder 1, %s14
    %p255 = scmp.lt.s32.totalorder %s14, 3
    %p256 = pnand %p254, %p255
    %p257 = pneg %p256
    // Predicated region
    $region9: #{dcfnet_forward.3} parent=5 // pred_check
      _
    $region10: #{dcfnet_forward.3} parent=5 // pred_check_branch
      %259 = sbr.rel (%p256) target = $region12
    $region11: #{dcfnet_forward.3} parent=5 // pred_region
      %s260 = ssub.s32 %s14, 1
      // Predicated region
      $region13: #{dcfnet_forward.3} parent=11 // pred_check
        %p261 = pneg %p164
      $region14: #{dcfnet_forward.3} parent=11 // pred_check_branch
        %263 = sbr.rel (%p261) target = $region16
      $region15: #{dcfnet_forward.3} parent=11 // pred_region
        %p264 = scmp.lt.s32.totalorder %s24, 0
        %s265 = scalar_select %p264, %s24, 0
        %s266 = scalar_lea.vmem %s4, %s265
      $region16: #{dcfnet_forward.3} parent=11 // pred_fallthru
        _
      // Predicated region
      $region17: #{dcfnet_forward.3} parent=11 // pred_check
        %p267 = pneg %p190
      $region18: #{dcfnet_forward.3} parent=11 // pred_check_branch
        %269 = sbr.rel (%p267) target = $region20
      $region19: #{dcfnet_forward.3} parent=11 // pred_region
        %p270 = scmp.lt.s32.totalorder %s24, 0
        %s271 = scalar_select %p270, %s24, 0
        %s272 = scalar_lea.vmem %s5, %s271
      $region20: #{dcfnet_forward.3} parent=11 // pred_fallthru
        _
    $region12: #{dcfnet_forward.3} parent=5 // pred_fallthru
      _
    %p273 = scmp.lt.s32.totalorder %s14, 2
    // Predicated region
    $region21: #{dcfnet_forward.3} parent=5 // pred_check
      %p274 = pneg %p273
    $region22: #{dcfnet_forward.3} parent=5 // pred_check_branch
      %276 = sbr.rel (%p274) target = $region24
    $region23: #{dcfnet_forward.3} parent=5 // pred_region
      // Predicated region
      $region25: #{dcfnet_forward.3} parent=23 // pred_check
        %p277 = pneg %p48
      $region26: #{dcfnet_forward.3} parent=23 // pred_check_branch
        %279 = sbr.rel (%p277) target = $region28
      $region27: #{dcfnet_forward.3} parent=23 // pred_region
        %p280 = scmp.lt.s32.totalorder %s21, 1
        %s281 = scalar_select %p280, %s21, 1
        %p282 = scmp.lt.s32.totalorder %s22, 0
        %s283 = scalar_select %p282, %s22, 0
        %s284 = smul.addr %s281, 4
        %s285 = sadd.s32 %s283, %s284
        %s286 = smul.addr %s285, 8
        %s287 = scalar_lea.vmem %s0, %s286
      $region28: #{dcfnet_forward.3} parent=23 // pred_fallthru
        _
      // Predicated region
      $region29: #{dcfnet_forward.3} parent=23 // pred_check
        %p288 = pneg %p76
      $region30: #{dcfnet_forward.3} parent=23 // pred_check_branch
        %290 = sbr.rel (%p288) target = $region32
      $region31: #{dcfnet_forward.3} parent=23 // pred_region
        %p291 = scmp.lt.s32.totalorder %s21, 1
        %s292 = scalar_select %p291, %s21, 1
        %p293 = scmp.lt.s32.totalorder %s22, 0
        %s294 = scalar_select %p293, %s22, 0
        %s295 = smul.addr %s292, 4
        %s296 = sadd.s32 %s294, %s295
        %s297 = smul.addr %s296, 8
        %s298 = scalar_lea.vmem %s1, %s297
      $region32: #{dcfnet_forward.3} parent=23 // pred_fallthru
        _
      // Predicated region
      $region33: #{dcfnet_forward.3} parent=23 // pred_check
        %p299 = pneg %p104
      $region34: #{dcfnet_forward.3} parent=23 // pred_check_branch
        %301 = sbr.rel (%p299) target = $region36
      $region35: #{dcfnet_forward.3} parent=23 // pred_region
        %p302 = scmp.lt.s32.totalorder %s21, 1
        %s303 = scalar_select %p302, %s21, 1
        %p304 = scmp.lt.s32.totalorder %s22, 0
        %s305 = scalar_select %p304, %s22, 0
        %s306 = smul.addr %s303, 4
        %s307 = sadd.s32 %s305, %s306
        %s308 = smul.addr %s307, 8
        %s309 = scalar_lea.vmem %s2, %s308
      $region36: #{dcfnet_forward.3} parent=23 // pred_fallthru
        _
      // Predicated region
      $region37: #{dcfnet_forward.3} parent=23 // pred_check
        %p310 = pneg %p132
      $region38: #{dcfnet_forward.3} parent=23 // pred_check_branch
        %312 = sbr.rel (%p310) target = $region40
      $region39: #{dcfnet_forward.3} parent=23 // pred_region
        %p313 = scmp.lt.s32.totalorder %s21, 1
        %s314 = scalar_select %p313, %s21, 1
        %p315 = scmp.lt.s32.totalorder %s22, 0
        %s316 = scalar_select %p315, %s22, 0
        %s317 = smul.addr %s314, 4
        %s318 = sadd.s32 %s316, %s317
        %s319 = smul.addr %s318, 8
        %s320 = scalar_lea.vmem %s3, %s319
      $region40: #{dcfnet_forward.3} parent=23 // pred_fallthru
        _
    $region24: #{dcfnet_forward.3} parent=5 // pred_fallthru
      _
    %p321 = scmp.le.s32.totalorder 1, %s14
    %p322 = scmp.lt.s32.totalorder %s14, 3
    %p323 = pnand %p321, %p322
    %p324 = pneg %p323
    // Predicated region
    $region41: #{dcfnet_forward.3} parent=5 // pred_check
      _
    $region42: #{dcfnet_forward.3} parent=5 // pred_check_branch
      %326 = sbr.rel (%p323) target = $region44
    $region43: #{dcfnet_forward.3} parent=5 // pred_region
      %s327 = ssub.s32 %s14, 1
      %p328 = scmp.lt.s32.totalorder %s23, 1
      %s329 = scalar_select %p328, %s23, 1
      %p330 = scmp.lt.s32.totalorder %s24, 0
      %s331 = scalar_select %p330, %s24, 0
      %s332 = smul.addr %s329, 4
      %s333 = sadd.s32 %s331, %s332
      %s334 = smul.addr %s333, 8
      %s335 = scalar_lea.vmem %s0, %s334
      %p336 = pneg %p54
      %p337 = pneg %p51
      %p338 = scmp.lt.s32.totalorder %s23, 1
      %s339 = scalar_select %p338, %s23, 1
      %p340 = scmp.lt.s32.totalorder %s24, 0
      %s341 = scalar_select %p340, %s24, 0
      %s342 = smul.addr %s339, 4
      %s343 = sadd.s32 %s341, %s342
      %s344 = smul.addr %s343, 8
      %s345 = scalar_lea.vmem %s1, %s344
      %p346 = pneg %p82
      %p347 = pneg %p79
      %p348 = scmp.lt.s32.totalorder %s23, 1
      %s349 = scalar_select %p348, %s23, 1
      %p350 = scmp.lt.s32.totalorder %s24, 0
      %s351 = scalar_select %p350, %s24, 0
      %s352 = smul.addr %s349, 4
      %s353 = sadd.s32 %s351, %s352
      %s354 = smul.addr %s353, 8
      %s355 = scalar_lea.vmem %s2, %s354
      %p356 = pneg %p110
      %p357 = pneg %p107
      %p358 = scmp.lt.s32.totalorder %s23, 1
      %s359 = scalar_select %p358, %s23, 1
      %p360 = scmp.lt.s32.totalorder %s24, 0
      %s361 = scalar_select %p360, %s24, 0
      %s362 = smul.addr %s359, 4
      %s363 = sadd.s32 %s361, %s362
      %s364 = smul.addr %s363, 8
      %s365 = scalar_lea.vmem %s3, %s364
      %p366 = pneg %p138
      %p367 = pneg %p135
      %p368 = scmp.lt.s32.totalorder %s24, 0
      %s369 = scalar_select %p368, %s24, 0
      %s370 = scalar_lea.vmem %s4, %s369
      %p371 = pneg %p164
      %p372 = pneg %p161
      %p373 = scmp.lt.s32.totalorder %s24, 0
      %s374 = scalar_select %p373, %s24, 0
      %s375 = scalar_lea.vmem %s5, %s374
      %p376 = pneg %p190
      %p377 = pneg %p187
      %p378 = pneg %p218
      %p379 = pneg %p215
      %p380 = scmp.lt.s32.totalorder %s23, 1
      %s381 = scalar_select %p380, %s23, 1
      %p382 = scmp.lt.s32.totalorder %s24, 0
      %s383 = scalar_select %p382, %s24, 0
      %s384 = sadd.s32 %s383, %s381
      %s385 = scalar_lea.vmem %s6, %s384
      %p386 = pneg %p246
      %p387 = pneg %p243
      %p388 = scmp.lt.s32.totalorder %s23, 1
      %s389 = scalar_select %p388, %s23, 1
      %p390 = scmp.lt.s32.totalorder %s24, 0
      %s391 = scalar_select %p390, %s24, 0
      %s392 = sadd.s32 %s391, %s389
      %s393 = scalar_lea.vmem %s7, %s392
      %p394 = scmp.lt.s32.totalorder %s23, 1
      %s395 = scalar_select %p394, %s23, 1
      %p396 = scmp.lt.s32.totalorder %s24, 0
      %s397 = scalar_select %p396, %s24, 0
      %s398 = smul.addr %s395, 4
      %s399 = sadd.s32 %s397, %s398
      %s400 = smul.addr %s399, 8
      %s401 = scalar_lea.vmem %s0, %s400
      %p402 = scmp.lt.s32.totalorder %s23, 1
      %s403 = scalar_select %p402, %s23, 1
      %p404 = scmp.lt.s32.totalorder %s24, 0
      %s405 = scalar_select %p404, %s24, 0
      %s406 = smul.addr %s403, 4
      %s407 = sadd.s32 %s405, %s406
      %s408 = smul.addr %s407, 8
      %s409 = scalar_lea.vmem %s1, %s408
      %p410 = scmp.lt.s32.totalorder %s23, 1
      %s411 = scalar_select %p410, %s23, 1
      %p412 = scmp.lt.s32.totalorder %s24, 0
      %s413 = scalar_select %p412, %s24, 0
      %s414 = smul.addr %s411, 4
      %s415 = sadd.s32 %s413, %s414
      %s416 = smul.addr %s415, 8
      %s417 = scalar_lea.vmem %s2, %s416
      %p418 = scmp.lt.s32.totalorder %s23, 1
      %s419 = scalar_select %p418, %s23, 1
      %p420 = scmp.lt.s32.totalorder %s24, 0
      %s421 = scalar_select %p420, %s24, 0
      %s422 = smul.addr %s419, 4
      %s423 = sadd.s32 %s421, %s422
      %s424 = smul.addr %s423, 8
      %s425 = scalar_lea.vmem %s3, %s424
      %p426 = scmp.lt.s32.totalorder %s24, 0
      %s427 = scalar_select %p426, %s24, 0
      %s428 = scalar_lea.vmem %s4, %s427
      %p429 = scmp.lt.s32.totalorder %s24, 0
      %s430 = scalar_select %p429, %s24, 0
      %s431 = scalar_lea.vmem %s5, %s430
      %p432 = scmp.lt.s32.totalorder %s23, 1
      %s433 = scalar_select %p432, %s23, 1
      %p434 = scmp.lt.s32.totalorder %s24, 0
      %s435 = scalar_select %p434, %s24, 0
      %s436 = sadd.s32 %s435, %s433
      %s437 = scalar_lea.vmem %s6, %s436
      %p438 = scmp.lt.s32.totalorder %s23, 1
      %s439 = scalar_select %p438, %s23, 1
      %p440 = scmp.lt.s32.totalorder %s24, 0
      %s441 = scalar_select %p440, %s24, 0
      %s442 = sadd.s32 %s441, %s439
      %s443 = scalar_lea.vmem %s7, %s442
      %v444 = vld [vmem:[%s401] sm:$0xff]
      %v445 = vld [vmem:[%s401 + $0x8] sm:$0xff]
      %v446 = vld [vmem:[%s401 + $0x10] sm:$0xff]
      %v447 = vld [vmem:[%s401 + $0x18] sm:$0xff]
      %v448 = vld [vmem:[%s409] sm:$0xff]
      %v449 = vld [vmem:[%s409 + $0x8] sm:$0xff]
      %v450 = vld [vmem:[%s409 + $0x10] sm:$0xff]
      %v451 = vld [vmem:[%s409 + $0x18] sm:$0xff]
      %v452 = vld [vmem:[%s417] sm:$0xff]
      %v453 = vld [vmem:[%s417 + $0x8] sm:$0xff]
      %v454 = vld [vmem:[%s417 + $0x10] sm:$0xff]
      %v455 = vld [vmem:[%s417 + $0x18] sm:$0xff]
      %v456 = vld [vmem:[%s425] sm:$0xff]
      %v457 = vld [vmem:[%s425 + $0x8] sm:$0xff]
      %v458 = vld [vmem:[%s425 + $0x10] sm:$0xff]
      %v459 = vld [vmem:[%s425 + $0x18] sm:$0xff]
      %v460 = vmul.f32 %v444, %v444
      %v461 = vmul.f32 %v445, %v445
      %v462 = vmul.f32 %v446, %v446
      %v463 = vmul.f32 %v447, %v447
      %v464 = vmul.f32 %v448, %v448
      %v465 = vmul.f32 %v449, %v449
      %v466 = vmul.f32 %v450, %v450
      %v467 = vmul.f32 %v451, %v451
      %v468 = vadd.f32 %v460, %v464
      %v469 = vadd.f32 %v461, %v465
      %v470 = vadd.f32 %v462, %v466
      %v471 = vadd.f32 %v463, %v467
      %v472 = vadd.f32 %v468, %v469
      %v473 = vadd.f32 %v472, %v470
      %v474 = vadd.f32 %v473, %v471
      %v475 = vrot.slane %v474, 4
      %v476 = vadd.f32 %v474, %v475
      %v477 = vrot.slane %v476, 2
      %v478 = vadd.f32 %v476, %v477
      %v479 = vrot.slane %v478, 1
      %v480 = vadd.f32 %v478, %v479
      %v481 = vmul.f32 %v452, %v444
      %v482 = vmul.f32 %v453, %v445
      %v483 = vmul.f32 %v454, %v446
      %v484 = vmul.f32 %v455, %v447
      %v485 = vmul.f32 %v456, %v448
      %v486 = vmul.f32 %v457, %v449
      %v487 = vmul.f32 %v458, %v450
      %v488 = vmul.f32 %v459, %v451
      %v489 = vadd.f32 %v481, %v485
      %v490 = vadd.f32 %v482, %v486
      %v491 = vadd.f32 %v483, %v487
      %v492 = vadd.f32 %v484, %v488
      %v493 = vadd.f32 %v489, %v490
      %v494 = vadd.f32 %v493, %v491
      %v495 = vadd.f32 %v494, %v492
      %v496 = vrot.slane %v495, 4
      %v497 = vadd.f32 %v495, %v496
      %v498 = vrot.slane %v497, 2
      %v499 = vadd.f32 %v497, %v498
      %v500 = vrot.slane %v499, 1
      %v501 = vadd.f32 %v499, %v500
      %v502 = vmul.f32 %v456, %v444
      %v503 = vmul.f32 %v457, %v445
      %v504 = vmul.f32 %v458, %v446
      %v505 = vmul.f32 %v459, %v447
      %v506 = vmul.f32 %v452, %v448
      %v507 = vmul.f32 %v453, %v449
      %v508 = vmul.f32 %v454, %v450
      %v509 = vmul.f32 %v455, %v451
      %v510 = vsub.f32 %v502, %v506
      %v511 = vsub.f32 %v503, %v507
      %v512 = vsub.f32 %v504, %v508
      %v513 = vsub.f32 %v505, %v509
      %v514 = vadd.f32 %v510, %v511
      %v515 = vadd.f32 %v514, %v512
      %v516 = vadd.f32 %v515, %v513
      %v517 = vrot.slane %v516, 4
      %v518 = vadd.f32 %v516, %v517
      %v519 = vrot.slane %v518, 2
      %v520 = vadd.f32 %v518, %v519
      %v521 = vrot.slane %v520, 1
      %v522 = vadd.f32 %v520, %v521
      %v523 = vadd.f32 %v480, 0.0001
      %v524 = vrcp.pop %v523
      %v525 = vmul.f32 %v523, %v524
      %v526 = vsub.f32 1.0, %v525
      %v527 = vmul.f32 %v524, %v526
      %v528 = vadd.f32 %v524, %v527
      %vm529 = vweird.f32 %v523
      %vm530 = vweird.f32 %v524
      %vm531 = vmor %vm529, %vm530
      %v532 = vsel %vm531, %v524, %v528
      %v533 = vand.u32 2147483647, %v523
      %vm534 = vcmp.eq.f32.partialorder %v533, 8.507059e+37
      %v535 = vand.u32 %v523, 2147483648
      %v536 = vor.u32 1.1754944e-38, %v535
      %v537 = vsel %vm534, %v536, %v532
      %v538 = vld [vmem:[%s428] sm:$0x1]
      %v539 = vmul.f32 %v538, %v537
      %v540 = vld [vmem:[%s431] sm:$0x1]
      %v541 = vmul.f32 %v540, %v537
      %v542 = vmul.f32 %v501, %v539
      %v543 = vmul.f32 %v522, %v541
      %v544 = vsub.f32 %v542, %v543
      %545 = vst [vmem:[%s437] sm:$0x1] %v544
      %v546 = vmul.f32 %v501, %v541
      %v547 = vmul.f32 %v522, %v539
      %v548 = vadd.f32 %v546, %v547
      %549 = vst [vmem:[%s443] sm:$0x1] %v548
      %p550 = scmp.lt.s32.totalorder %s23, 1
      %s551 = scalar_select %p550, %s23, 1
      %p552 = scmp.lt.s32.totalorder %s24, 0
      %s553 = scalar_select %p552, %s24, 0
      %s554 = sadd.s32 %s553, %s551
      %s555 = scalar_lea.vmem %s6, %s554
      %p556 = scmp.lt.s32.totalorder %s23, 1
      %s557 = scalar_select %p556, %s23, 1
      %p558 = scmp.lt.s32.totalorder %s24, 0
      %s559 = scalar_select %p558, %s24, 0
      %s560 = sadd.s32 %s559, %s557
      %s561 = scalar_lea.vmem %s7, %s560
      // Predicated region
      $region45: #{dcfnet_forward.3} parent=43 // pred_check
        %p562 = pneg %p215
      $region46: #{dcfnet_forward.3} parent=43 // pred_check_branch
        %564 = sbr.rel (%p562) target = $region48
      $region47: #{dcfnet_forward.3} parent=43 // pred_region
        _
      $region48: #{dcfnet_forward.3} parent=43 // pred_fallthru
        _
      // Predicated region
      $region49: #{dcfnet_forward.3} parent=43 // pred_check
        %p565 = pneg %p243
      $region50: #{dcfnet_forward.3} parent=43 // pred_check_branch
        %567 = sbr.rel (%p565) target = $region52
      $region51: #{dcfnet_forward.3} parent=43 // pred_region
        _
      $region52: #{dcfnet_forward.3} parent=43 // pred_fallthru
        _
    $region44: #{dcfnet_forward.3} parent=5 // pred_fallthru
      _
    %p568 = scmp.le.s32.totalorder 2, %s14
    // Predicated region
    $region53: #{dcfnet_forward.3} parent=5 // pred_check
      %p569 = pneg %p568
    $region54: #{dcfnet_forward.3} parent=5 // pred_check_branch
      %571 = sbr.rel (%p569) target = $region56
    $region55: #{dcfnet_forward.3} parent=5 // pred_region
      %s572 = ssub.s32 %s14, 2
      // Predicated region
      $region57: #{dcfnet_forward.3} parent=55 // pred_check
        %p573 = pneg %p221
      $region58: #{dcfnet_forward.3} parent=55 // pred_check_branch
        %575 = sbr.rel (%p573) target = $region60
      $region59: #{dcfnet_forward.3} parent=55 // pred_region
        %p576 = scmp.lt.s32.totalorder %s25, 1
        %s577 = scalar_select %p576, %s25, 1
        %p578 = scmp.lt.s32.totalorder %s26, 0
        %s579 = scalar_select %p578, %s26, 0
        %s580 = sadd.s32 %s579, %s577
        %s581 = scalar_lea.vmem %s6, %s580
      $region60: #{dcfnet_forward.3} parent=55 // pred_fallthru
        _
      // Predicated region
      $region61: #{dcfnet_forward.3} parent=55 // pred_check
        %p582 = pneg %p249
      $region62: #{dcfnet_forward.3} parent=55 // pred_check_branch
        %584 = sbr.rel (%p582) target = $region64
      $region63: #{dcfnet_forward.3} parent=55 // pred_region
        %p585 = scmp.lt.s32.totalorder %s25, 1
        %s586 = scalar_select %p585, %s25, 1
        %p587 = scmp.lt.s32.totalorder %s26, 0
        %s588 = scalar_select %p587, %s26, 0
        %s589 = sadd.s32 %s588, %s586
        %s590 = scalar_lea.vmem %s7, %s589
      $region64: #{dcfnet_forward.3} parent=55 // pred_fallthru
        _
    $region56: #{dcfnet_forward.3} parent=5 // pred_fallthru
      _
  $region6: #{dcfnet_forward.3} parent=0 // loop_footer
    %s18 = sadd.s32 1, %s14
  $region7: #{dcfnet_forward.3} parent=0 // loop_footer_branch
    %13 = sbr.rel target = $region3
  $region8: #{dcfnet_forward.3} parent=0 // loop_exit
    _

// kernel: reverse.0
$region0: #{reverse.0}
  %s0 = inlined_call_operand.vmem [shape: f32[2,1,12,5], index: 0, kind: input, shape index: {}]
  %s1 = inlined_call_operand.vmem [shape: f32[2,1,12,5], index: 1, kind: output, shape index: {}]
  $region1: #{reverse.0} parent=0
    #allocation0 [shape = 'u8[16384]{0}', space=vmem, size = 0x4000, scoped, tag = 'operand span for operand 0']
    #allocation1 [shape = 'u8[8192]{0}', space=vmem, size = 0x2000, scoped, tag = 'operand span for operand 1']
    %s2 = scalar_lea.vmem [#allocation0], 8
    // Predicated region
    $region2: #{reverse.0} parent=1 // pred_check
      _
    $region3: #{reverse.0} parent=1 // pred_check_branch
      %4 = sbr.rel (0) target = $region5
    $region4: #{reverse.0} parent=1 // pred_region
      // Predicated region
      $region6: #{reverse.0} parent=4 // pred_check
        _
      $region7: #{reverse.0} parent=4 // pred_check_branch
        %6 = sbr.rel (0) target = $region9
      $region8: #{reverse.0} parent=4 // pred_region
        // Predicated region
        $region21: #{reverse.0} parent=8 // pred_check
          _
        $region22: #{reverse.0} parent=8 // pred_check_branch
          %24 = sbr.rel (0) target = $region24
        $region23: #{reverse.0} parent=8 // pred_region
          loop: start=0, step=1, limit=1
          $region25: #{reverse.0} parent=23 // loop_pre_header
            _
          $region26: #{reverse.0} parent=23 // loop_header
            %s26 = sphi 0, %s30
            %p27 = scmp.ge.s32.totalorder %s26, 1
            %s31 = sphi %s0, %s0
            %s32 = sphi %s2, %s2
          $region27: #{reverse.0} parent=23 // loop_header_branch
            %29 = sbr.rel (%p27) target = $region31
          $region28: #{reverse.0} parent=23 // loop_body
            %v33 = vld [vmem:[%s31] sm:$0xff]
            %34 = vst [vmem:[%s32] sm:$0xff] %v33
            %v35 = vld [vmem:[%s31 + $0x8] sm:$0xff]
            %36 = vst [vmem:[%s32 + $0x10] sm:$0xff] %v35
          $region29: #{reverse.0} parent=23 // loop_footer
            %s30 = sadd.s32 1, %s26
          $region30: #{reverse.0} parent=23 // loop_footer_branch
            %25 = sbr.rel target = $region26
          $region31: #{reverse.0} parent=23 // loop_exit
            _
        $region24: #{reverse.0} parent=8 // pred_fallthru
          _
        // Predicated region
        $region32: #{reverse.0} parent=8 // pred_check
          _
        $region33: #{reverse.0} parent=8 // pred_check_branch
          %38 = sbr.rel target = $region35
        $region34: #{reverse.0} parent=8 // pred_region
          _
        $region35: #{reverse.0} parent=8 // pred_fallthru
          _
      $region9: #{reverse.0} parent=4 // pred_fallthru
        _
      // Predicated region
      $region10: #{reverse.0} parent=4 // pred_check
        _
      $region11: #{reverse.0} parent=4 // pred_check_branch
        %8 = sbr.rel target = $region13
      $region12: #{reverse.0} parent=4 // pred_region
        %s10 = ssub.s32 256, 1
        loop: start=0, step=1, limit=1
        $region14: #{reverse.0} parent=12 // loop_pre_header
          _
        $region15: #{reverse.0} parent=12 // loop_header
          %s12 = sphi 0, %s16
          %p13 = scmp.ge.s32.totalorder %s12, 1
          %s17 = sphi %s0, %s0
          %s18 = sphi %s2, %s2
        $region16: #{reverse.0} parent=12 // loop_header_branch
          %15 = sbr.rel (%p13) target = $region20
        $region17: #{reverse.0} parent=12 // loop_body
          %v19 = vld [vmem:[%s17] sm:%s10]
          %20 = vst [vmem:[%s18] sm:%s10] %v19
          %v21 = vld [vmem:[%s17 + $0x8] sm:%s10]
          %22 = vst [vmem:[%s18 + $0x10] sm:%s10] %v21
        $region18: #{reverse.0} parent=12 // loop_footer
          %s16 = sadd.s32 1, %s12
        $region19: #{reverse.0} parent=12 // loop_footer_branch
          %11 = sbr.rel target = $region15
        $region20: #{reverse.0} parent=12 // loop_exit
          _
      $region13: #{reverse.0} parent=4 // pred_fallthru
        _
    $region5: #{reverse.0} parent=1 // pred_fallthru
      _
    %39 = vnop
    %s40 = scalar_lea.vmem [#allocation0], 7
    %v41 = vld [vmem:[%s40] ss:$-1 sm:$0xff]
    %v42 = vrot.slane %v41, 3
    %43 = vst [vmem:[#allocation1] sm:$0xff] %v42
    %s44 = scalar_lea.vmem [#allocation0], 8
    %s45 = scalar_lea.vmem %s44, 7 [#allocation0]
    %v46 = vld [vmem:[%s45] ss:$-1 sm:$0xff]
    %v47 = vrot.slane %v46, 3
    %v48 = vlaneseq
    %v49 = vshrl.u32 %v48, 7
    %vm50 = vcmp.lt.s32.totalorder %v49, 5
    %51 = vst.msk [vmem:[#allocation1] sm:$0xff] %vm50, %v47
    %s52 = scalar_lea.vmem [#allocation1], 8
    %s53 = scalar_lea.vmem [#allocation0], 16
    %s54 = scalar_lea.vmem %s53, 7 [#allocation0]
    %v55 = vld [vmem:[%s54] ss:$-1 sm:$0xff]
    %v56 = vrot.slane %v55, 3
    %57 = vst [vmem:[%s52] sm:$0xff] %v56
    %s58 = scalar_lea.vmem %s53, 8 [#allocation0]
    %s59 = scalar_lea.vmem %s58, 7 [#allocation0]
    %v60 = vld [vmem:[%s59] ss:$-1 sm:$0xff]
    %v61 = vrot.slane %v60, 3
    %v62 = vlaneseq
    %v63 = vshrl.u32 %v62, 7
    %vm64 = vcmp.lt.s32.totalorder %v63, 5
    %65 = vst.msk [vmem:[%s52] sm:$0xff] %vm64, %v61
    // Predicated region
    $region36: #{reverse.0} parent=1 // pred_check
      _
    $region37: #{reverse.0} parent=1 // pred_check_branch
      %67 = sbr.rel (0) target = $region39
    $region38: #{reverse.0} parent=1 // pred_region
      // Predicated region
      $region40: #{reverse.0} parent=38 // pred_check
        _
      $region41: #{reverse.0} parent=38 // pred_check_branch
        %69 = sbr.rel (0) target = $region43
      $region42: #{reverse.0} parent=38 // pred_region
        // Predicated region
        $region55: #{reverse.0} parent=42 // pred_check
          _
        $region56: #{reverse.0} parent=42 // pred_check_branch
          %87 = sbr.rel (0) target = $region58
        $region57: #{reverse.0} parent=42 // pred_region
          loop: start=0, step=1, limit=1
          $region59: #{reverse.0} parent=57 // loop_pre_header
            _
          $region60: #{reverse.0} parent=57 // loop_header
            %s89 = sphi 0, %s93
            %p90 = scmp.ge.s32.totalorder %s89, 1
            %s94 = sphi [#allocation1], [#allocation1]
            %s95 = sphi %s1, %s1
          $region61: #{reverse.0} parent=57 // loop_header_branch
            %92 = sbr.rel (%p90) target = $region65
          $region62: #{reverse.0} parent=57 // loop_body
            %v96 = vld [vmem:[%s94] sm:$0xff]
            %97 = vst [vmem:[%s95] sm:$0xff] %v96
            %v98 = vld [vmem:[%s94 + $0x8] sm:$0xff]
            %99 = vst [vmem:[%s95 + $0x8] sm:$0xff] %v98
          $region63: #{reverse.0} parent=57 // loop_footer
            %s93 = sadd.s32 1, %s89
          $region64: #{reverse.0} parent=57 // loop_footer_branch
            %88 = sbr.rel target = $region60
          $region65: #{reverse.0} parent=57 // loop_exit
            _
        $region58: #{reverse.0} parent=42 // pred_fallthru
          _
        // Predicated region
        $region66: #{reverse.0} parent=42 // pred_check
          _
        $region67: #{reverse.0} parent=42 // pred_check_branch
          %101 = sbr.rel target = $region69
        $region68: #{reverse.0} parent=42 // pred_region
          _
        $region69: #{reverse.0} parent=42 // pred_fallthru
          _
      $region43: #{reverse.0} parent=38 // pred_fallthru
        _
      // Predicated region
      $region44: #{reverse.0} parent=38 // pred_check
        _
      $region45: #{reverse.0} parent=38 // pred_check_branch
        %71 = sbr.rel target = $region47
      $region46: #{reverse.0} parent=38 // pred_region
        %s73 = ssub.s32 256, 1
        loop: start=0, step=1, limit=1
        $region48: #{reverse.0} parent=46 // loop_pre_header
          _
        $region49: #{reverse.0} parent=46 // loop_header
          %s75 = sphi 0, %s79
          %p76 = scmp.ge.s32.totalorder %s75, 1
          %s80 = sphi [#allocation1], [#allocation1]
          %s81 = sphi %s1, %s1
        $region50: #{reverse.0} parent=46 // loop_header_branch
          %78 = sbr.rel (%p76) target = $region54
        $region51: #{reverse.0} parent=46 // loop_body
          %v82 = vld [vmem:[%s80] sm:%s73]
          %83 = vst [vmem:[%s81] sm:%s73] %v82
          %v84 = vld [vmem:[%s80 + $0x8] sm:%s73]
          %85 = vst [vmem:[%s81 + $0x8] sm:%s73] %v84
        $region52: #{reverse.0} parent=46 // loop_footer
          %s79 = sadd.s32 1, %s75
        $region53: #{reverse.0} parent=46 // loop_footer_branch
          %74 = sbr.rel target = $region49
        $region54: #{reverse.0} parent=46 // loop_exit
          _
      $region47: #{reverse.0} parent=38 // pred_fallthru
        _
    $region39: #{reverse.0} parent=1 // pred_fallthru
      _
    %102 = vnop

</llo_original>
